<compile_context>
chip_gen: v7x
topology: tpu7x:2x2x1
jax: 0.10.0
libtpu: 0.0.40
codegen_flags: <defaults>
</compile_context>

<pallas_src>
from functools import partial

import numpy as np
import jax
import jax.numpy as jnp
from jax.experimental import pallas as pl
from jax.experimental.pallas import tpu as pltpu


# ------------------------------ Fused WGATdAgg kernel -------------------------------
def wgatd_kernel(x_ref, xt_ref, w_ref, b_ref, a1m_ref, w2t_ref, adj_ref, p_ref,
                 scal_ref, o_ref, *, H, D, L):
    # x_ref: (TB, L, d)      xt_ref: (TB, d, L)     w_ref: (d, H*d)   b_ref: (1, H*d)
    # a1m_ref: (H*d, H)      w2t_ref: (TB, H, d)    adj_ref: (TB, L, L)
    # p_ref: (H, L, H*L)     scal_ref (SMEM): (2, H) = [att3 ; bias·att2 per head]
    # o_ref: (TB, L, d)
    TB = x_ref.shape[0]
    HD = H * D
    HL = H * L

    # ---- shared linear: h = x @ W^T + b as a single well-shaped GEMM (M = TB*L)
    x2 = x_ref[...].reshape(TB * L, D)
    h2 = jnp.dot(x2, w_ref[...], preferred_element_type=jnp.float32) + b_ref[...]
    h3 = h2.reshape(TB, L, HD)

    # ---- per-head row term: S1[b, i, h] = sum_dd h[b,i,h*D+dd] * att1[h*D+dd]
    s1 = jnp.dot(h2, a1m_ref[...], preferred_element_type=jnp.float32)
    s1 = s1.reshape(TB, L, H)                                       # (TB, L, H)

    # ---- per-head column term, lane-major: S2[b, h, j] = sum_f W2[f,h] * x[b,j,f]
    s2 = jax.lax.dot_general(w2t_ref[...], xt_ref[...],
                             (((2,), (1,)), ((0,), (0,))),
                             preferred_element_type=jnp.float32)    # (TB, H, L)

    # ---- V (torch raw (B,L,H*d)->(B,H,L,d) reshape) as lane-chunk concat + perms
    vcat = jnp.concatenate([h3[:, :, c * D:(c + 1) * D] for c in range(H)],
                           axis=1)                                  # (TB, H*L, D)

    adj = adj_ref[...]                                              # (TB, L, L)
    neg = jnp.float32(-2 ** 31 + 1)
    mask = jnp.where(adj == 0.0, neg, jnp.float32(0.0))             # shared across heads

    acc = jnp.zeros((TB * L, HL), jnp.float32)
    # TODO(synk): switch to lax.fori_loop(..., unroll=True) if n_heads grows large.
    for hd in range(H):                                             # static unroll, H small
        al = (s1[:, :, hd:hd + 1]                                   # (TB, L, 1) row term
              + s2[:, hd:hd + 1, :] + scal_ref[1, hd]               # (TB, 1, L) col term
              + scal_ref[0, hd] * adj)                              # att3 * adj_out
        al = jnp.where(al > 0, al, 0.2 * al)                        # LeakyReLU(0.2)
        al = al + mask
        m = jnp.max(al, axis=1, keepdims=True)                      # softmax over dim 2
        e = jnp.exp(al - m)
        al = e / jnp.sum(e, axis=1, keepdims=True)
        acc = acc + jnp.dot(al.reshape(TB * L, L), p_ref[hd],
                            preferred_element_type=jnp.float32)     # (TB*L, H*L)

    w = jax.lax.dot_general(acc.reshape(TB, L, HL), vcat,
                            (((2,), (1,)), ((0,), (0,))),
                            preferred_element_type=jnp.float32)     # (TB, L, D)
    o_ref[...] = jnp.maximum(w * (1.0 / H), 0.0)                    # mean over heads + ReLU


# ------------------------------------ Wrapper ---------------------------------------
def wgatd_agg_forward(item_seq_emb, adj_in, adj_out, params, n_heads, *, batch_tile=None):
    del adj_in  # the PyTorch forward never uses adj_in
    W_t, bias, a1, a2, a3 = params
    B, L, d = item_seq_emb.shape
    H = n_heads
    HD = d * H

    TB = B if batch_tile is None else batch_tile
    assert B % TB == 0, "batch tile must divide batch"

    # A1: (HD, H) with each head's att1 vector in its own column -> S1 = h @ A1.
    eye_heads = jnp.repeat(jnp.eye(H, dtype=jnp.float32), d, axis=0)   # (HD, H)
    A1 = a1.reshape(HD, 1) * eye_heads

    # Fold att2 through the shared linear:  s2 = x @ W2 + c2  (per head, exact up to fp reassoc).
    W2 = (W_t.reshape(d, H, d) * a2.reshape(1, H, d)).sum(-1)          # (d, H)
    c2 = (bias.reshape(H, d) * a2.reshape(H, d)).sum(-1)               # (H,)
    W2T = jnp.broadcast_to(jnp.swapaxes(W2, 0, 1)[None], (B, H, d))    # (B, H, d)

    xT = jnp.swapaxes(item_seq_emb, 1, 2)                              # (B, d, L)

    # Column-permutation matrices realizing torch's raw (B,L,H*d)->(B,H,L,d) reshape:
    # V_h = P_h @ Vcat where Vcat[b, c*L+m, :] = h[b, m, c*d:(c+1)*d].
    P_np = np.zeros((H, L, H * L), np.float32)
    for hd in range(H):
        for l in range(L):
            k = hd * L + l
            P_np[hd, l, (k % H) * L + (k // H)] = 1.0
    P = jnp.asarray(P_np)

    scal = jnp.stack([a3.reshape(H), c2], axis=0)                      # (2, H) in SMEM

    kernel = partial(wgatd_kernel, H=H, D=d, L=L)
    out = pl.pallas_call(
        kernel,
        out_shape=jax.ShapeDtypeStruct((B, L, d), jnp.float32),
        grid=(B // TB,),
        in_specs=[
            pl.BlockSpec((TB, L, d), lambda b: (b, 0, 0)),       # x
            pl.BlockSpec((TB, d, L), lambda b: (b, 0, 0)),       # x^T (lane-major seq)
            pl.BlockSpec((d, HD), lambda b: (0, 0)),             # shared_linear weight^T
            pl.BlockSpec((1, HD), lambda b: (0, 0)),             # shared_linear bias
            pl.BlockSpec((HD, H), lambda b: (0, 0)),             # A1 (att1 per column)
            pl.BlockSpec((TB, H, d), lambda b: (b, 0, 0)),       # W2^T (att2 folded)
            pl.BlockSpec((TB, L, L), lambda b: (b, 0, 0)),       # adj_out
            pl.BlockSpec((H, L, H * L), lambda b: (0, 0, 0)),    # P permutations
            pl.BlockSpec(memory_space=pltpu.SMEM),               # [att3 ; bias·att2]
        ],
        out_specs=pl.BlockSpec((TB, L, d), lambda b: (b, 0, 0)),
        compiler_params=pltpu.CompilerParams(dimension_semantics=("parallel",)),
    )(item_seq_emb, xT, W_t, bias.reshape(1, HD), A1, W2T, adj_out, P, scal)
    return out


# ------------------------------ Pure-JAX reference ----------------------------------
def reference_forward(x, adj_out, W_t, bias, a1, a2, a3, H):
    B, L, d = x.shape
    h = x @ W_t + bias                                                     # (B,L,H*d)
    p1 = (h * a1).reshape(B, L, H, d).sum(3).transpose(0, 2, 1)[:, :, :, None]  # (B,H,L,1)
    p2 = (h * a2).reshape(B, L, H, d).sum(3).transpose(0, 2, 1)[:, :, None, :]  # (B,H,1,L)
    p3 = (a3 * adj_out[..., None]).transpose(0, 3, 1, 2)                   # (B,H,L,L)
    alpha = p1 + p2 + p3
    alpha = jnp.where(alpha > 0, alpha, 0.2 * alpha)
    mask = jnp.where(adj_out == 0, jnp.float32(-2 ** 31 + 1), 0.0)[:, None]  # (B,1,L,L)
    alpha = jax.nn.softmax(alpha + mask, axis=2)
    Vr = h.reshape(B, H, L, d)
    w = jnp.einsum("bhij,bhjd->bhid", alpha, Vr)
    return jnp.maximum(w.mean(axis=1), 0.0)


# -------------------------------------- Main ----------------------------------------
if __name__ == "__main__":
    B, L, d, H = 2, 8, 32, 4
    HD = d * H

    key = jax.random.PRNGKey(0)
    ks = jax.random.split(key, 9)

    # Deterministic parameter init (shapes from WGATdAgg.__init__).
    W_t = jax.random.normal(ks[0], (d, HD), jnp.float32) * 0.1     # shared_linear weight^T
    bias = jax.random.normal(ks[1], (HD,), jnp.float32) * 0.1      # shared_linear bias
    a1 = jax.random.normal(ks[2], (1, HD), jnp.float32) * 0.1      # att1_linear
    a2 = jax.random.normal(ks[3], (1, HD), jnp.float32) * 0.1      # att2_linear
    a3 = jax.random.normal(ks[4], (1, H), jnp.float32) * 0.1       # att3_weight

    x = jax.random.normal(ks[5], (B, L, d), jnp.float32)
    adj_in = jax.random.normal(ks[6], (B, L, L), jnp.float32)      # unused by forward
    u = jax.random.uniform(ks[7], (B, L, L))
    v = jax.random.uniform(ks[8], (B, L, L))
    adj_out = jnp.where(u > 0.5, v, 0.0) + 0.5 * jnp.eye(L, dtype=jnp.float32)[None]

    params = (W_t, bias, a1, a2, a3)
    out = wgatd_agg_forward(x, adj_in, adj_out, params, H)
    out = jax.block_until_ready(out)

    ref = reference_forward(x, adj_out, W_t, bias, a1, a2, a3, H)
    assert out.shape == (B, L, d)
    assert jnp.allclose(out, ref, rtol=1e-4, atol=1e-4), float(jnp.max(jnp.abs(out - ref)))

    print("KERNEL_OK")
</pallas_src>

<mosaic_0001>
module attributes {stable_mosaic.version = 11 : i64} {
  func.func @wgatd_kernel(%arg0: i32, %arg1: memref<2x8x32xf32, #tpu.memory_space<vmem>>, %arg2: memref<2x32x8xf32, #tpu.memory_space<vmem>>, %arg3: memref<32x128xf32, #tpu.memory_space<vmem>>, %arg4: memref<1x128xf32, #tpu.memory_space<vmem>>, %arg5: memref<128x4xf32, #tpu.memory_space<vmem>>, %arg6: memref<2x4x32xf32, #tpu.memory_space<vmem>>, %arg7: memref<2x8x8xf32, #tpu.memory_space<vmem>>, %arg8: memref<4x8x32xf32, #tpu.memory_space<vmem>>, %arg9: memref<2x4xf32, #tpu.memory_space<smem>>, %arg10: memref<2x8x32xf32, #tpu.memory_space<vmem>>) attributes {dimension_semantics = [#tpu.dimension_semantics<parallel>], iteration_bounds = array<i64: 1>, scalar_prefetch = 0 : i64, scratch_operands = 0 : i64, tpu.core_type = #tpu.core_type<tc>, window_params = [{transform_indices = @transform_0, window_bounds = array<i64: 2, 8, 32>}, {transform_indices = @transform_1, window_bounds = array<i64: 2, 32, 8>}, {pipeline_mode = #tpu.pipeline_mode<synchronous>, transform_indices = @transform_2, window_bounds = array<i64: 32, 128>}, {pipeline_mode = #tpu.pipeline_mode<synchronous>, transform_indices = @transform_3, window_bounds = array<i64: 1, 128>}, {pipeline_mode = #tpu.pipeline_mode<synchronous>, transform_indices = @transform_4, window_bounds = array<i64: 128, 4>}, {transform_indices = @transform_5, window_bounds = array<i64: 2, 4, 32>}, {transform_indices = @transform_6, window_bounds = array<i64: 2, 8, 8>}, {pipeline_mode = #tpu.pipeline_mode<synchronous>, transform_indices = @transform_7, window_bounds = array<i64: 4, 8, 32>}, {transform_indices = @transform_8, window_bounds = array<i64: 2, 4>}, {transform_indices = @transform_9, window_bounds = array<i64: 2, 8, 32>}]} {
    %c0 = arith.constant 0 : index
    %c0_0 = arith.constant 0 : index
    %c0_1 = arith.constant 0 : index
    %0 = vector.load %arg1[%c0, %c0_0, %c0_1] : memref<2x8x32xf32, #tpu.memory_space<vmem>>, vector<2x8x32xf32>
    %1 = vector.shape_cast %0 : vector<2x8x32xf32> to vector<16x32xf32>
    %c0_2 = arith.constant 0 : index
    %c0_3 = arith.constant 0 : index
    %2 = vector.load %arg3[%c0_2, %c0_3] : memref<32x128xf32, #tpu.memory_space<vmem>>, vector<32x128xf32>
    %cst = arith.constant dense<0.000000e+00> : vector<16x128xf32>
    %3 = tpu.matmul %1, %2, %cst {dimension_numbers = #tpu.dot_dimension_numbers<[1], [0], [0], [1], [0, 0, 1, 1], [], []>} : vector<16x32xf32>, vector<32x128xf32>, vector<16x128xf32> -> vector<16x128xf32>
    %c0_4 = arith.constant 0 : index
    %c0_5 = arith.constant 0 : index
    %4 = vector.load %arg4[%c0_4, %c0_5] : memref<1x128xf32, #tpu.memory_space<vmem>>, vector<1x128xf32>
    %5 = vector.broadcast %4 : vector<1x128xf32> to vector<16x128xf32>
    %6 = arith.addf %3, %5 : vector<16x128xf32>
    %7 = vector.shape_cast %6 : vector<16x128xf32> to vector<2x8x128xf32>
    %c0_6 = arith.constant 0 : index
    %c0_7 = arith.constant 0 : index
    %8 = vector.load %arg5[%c0_6, %c0_7] : memref<128x4xf32, #tpu.memory_space<vmem>>, vector<128x4xf32>
    %cst_8 = arith.constant dense<0.000000e+00> : vector<16x4xf32>
    %9 = tpu.matmul %6, %8, %cst_8 {dimension_numbers = #tpu.dot_dimension_numbers<[1], [0], [0], [1], [0, 0, 1, 1], [], []>} : vector<16x128xf32>, vector<128x4xf32>, vector<16x4xf32> -> vector<16x4xf32>
    %10 = vector.shape_cast %9 : vector<16x4xf32> to vector<2x8x4xf32>
    %c0_9 = arith.constant 0 : index
    %c0_10 = arith.constant 0 : index
    %c0_11 = arith.constant 0 : index
    %11 = vector.load %arg6[%c0_9, %c0_10, %c0_11] : memref<2x4x32xf32, #tpu.memory_space<vmem>>, vector<2x4x32xf32>
    %c0_12 = arith.constant 0 : index
    %c0_13 = arith.constant 0 : index
    %c0_14 = arith.constant 0 : index
    %12 = vector.load %arg2[%c0_12, %c0_13, %c0_14] : memref<2x32x8xf32, #tpu.memory_space<vmem>>, vector<2x32x8xf32>
    %cst_15 = arith.constant dense<0.000000e+00> : vector<2x4x8xf32>
    %13 = tpu.matmul %11, %12, %cst_15 {dimension_numbers = #tpu.dot_dimension_numbers<[2], [1], [1], [2], [0, 0, 0, 1, 1, 2], [0], [0]>} : vector<2x4x32xf32>, vector<2x32x8xf32>, vector<2x4x8xf32> -> vector<2x4x8xf32>
    %14 = vector.extract_strided_slice %7 {offsets = [0, 0, 0], sizes = [2, 8, 32], strides = [1, 1, 1]} : vector<2x8x128xf32> to vector<2x8x32xf32>
    %15 = vector.extract_strided_slice %7 {offsets = [0, 0, 32], sizes = [2, 8, 32], strides = [1, 1, 1]} : vector<2x8x128xf32> to vector<2x8x32xf32>
    %16 = vector.extract_strided_slice %7 {offsets = [0, 0, 64], sizes = [2, 8, 32], strides = [1, 1, 1]} : vector<2x8x128xf32> to vector<2x8x32xf32>
    %17 = vector.extract_strided_slice %7 {offsets = [0, 0, 96], sizes = [2, 8, 32], strides = [1, 1, 1]} : vector<2x8x128xf32> to vector<2x8x32xf32>
    %18 = tpu.concatenate %14, %15, %16, %17 in 1 : vector<2x8x32xf32>, vector<2x8x32xf32>, vector<2x8x32xf32>, vector<2x8x32xf32> -> vector<2x32x32xf32>
    %c0_16 = arith.constant 0 : index
    %c0_17 = arith.constant 0 : index
    %c0_18 = arith.constant 0 : index
    %19 = vector.load %arg7[%c0_16, %c0_17, %c0_18] : memref<2x8x8xf32, #tpu.memory_space<vmem>>, vector<2x8x8xf32>
    %cst_19 = arith.constant 0.000000e+00 : f32
    %20 = vector.broadcast %cst_19 : f32 to vector<2x8x8xf32>
    %21 = arith.cmpf oeq, %19, %20 : vector<2x8x8xf32>
    %cst_20 = arith.constant -2.14748365E+9 : f32
    %cst_21 = arith.constant 0.000000e+00 : f32
    %22 = vector.broadcast %cst_20 : f32 to vector<2x8x8xf32>
    %23 = vector.broadcast %cst_21 : f32 to vector<2x8x8xf32>
    %24 = arith.select %21, %22, %23 : vector<2x8x8xi1>, vector<2x8x8xf32>
    %cst_22 = arith.constant 0.000000e+00 : f32
    %25 = vector.broadcast %cst_22 : f32 to vector<16x32xf32>
    %26 = vector.extract_strided_slice %10 {offsets = [0, 0, 0], sizes = [2, 8, 1], strides = [1, 1, 1]} : vector<2x8x4xf32> to vector<2x8x1xf32>
    %27 = vector.extract_strided_slice %13 {offsets = [0, 0, 0], sizes = [2, 1, 8], strides = [1, 1, 1]} : vector<2x4x8xf32> to vector<2x1x8xf32>
    %28 = vector.broadcast %26 : vector<2x8x1xf32> to vector<2x8x8xf32>
    %29 = vector.broadcast %27 : vector<2x1x8xf32> to vector<2x8x8xf32>
    %30 = arith.addf %28, %29 : vector<2x8x8xf32>
    %c1 = arith.constant 1 : index
    %c0_23 = arith.constant 0 : index
    %31 = memref.load %arg9[%c1, %c0_23] : memref<2x4xf32, #tpu.memory_space<smem>>
    %32 = vector.broadcast %31 : f32 to vector<2x8x8xf32>
    %33 = arith.addf %30, %32 : vector<2x8x8xf32>
    %c0_24 = arith.constant 0 : index
    %c0_25 = arith.constant 0 : index
    %34 = memref.load %arg9[%c0_24, %c0_25] : memref<2x4xf32, #tpu.memory_space<smem>>
    %35 = vector.broadcast %34 : f32 to vector<2x8x8xf32>
    %36 = arith.mulf %35, %19 : vector<2x8x8xf32>
    %37 = arith.addf %33, %36 : vector<2x8x8xf32>
    %cst_26 = arith.constant 0.000000e+00 : f32
    %38 = vector.broadcast %cst_26 : f32 to vector<2x8x8xf32>
    %39 = arith.cmpf ogt, %37, %38 : vector<2x8x8xf32>
    %cst_27 = arith.constant 2.000000e-01 : f32
    %40 = vector.broadcast %cst_27 : f32 to vector<2x8x8xf32>
    %41 = arith.mulf %40, %37 : vector<2x8x8xf32>
    %42 = arith.select %39, %37, %41 : vector<2x8x8xi1>, vector<2x8x8xf32>
    %43 = arith.addf %42, %24 : vector<2x8x8xf32>
    %cst_28 = arith.constant dense<0xFF800000> : vector<2x8xf32>
    %44 = vector.multi_reduction <maximumf>, %43, %cst_28 [1] : vector<2x8x8xf32> to vector<2x8xf32>
    %45 = vector.shape_cast %44 : vector<2x8xf32> to vector<2x1x8xf32>
    %46 = vector.broadcast %45 : vector<2x1x8xf32> to vector<2x8x8xf32>
    %47 = arith.subf %43, %46 : vector<2x8x8xf32>
    %48 = math.exp %47 : vector<2x8x8xf32>
    %cst_29 = arith.constant dense<0.000000e+00> : vector<2x8xf32>
    %49 = vector.multi_reduction <add>, %48, %cst_29 [1] : vector<2x8x8xf32> to vector<2x8xf32>
    %50 = vector.shape_cast %49 : vector<2x8xf32> to vector<2x1x8xf32>
    %51 = vector.broadcast %50 : vector<2x1x8xf32> to vector<2x8x8xf32>
    %52 = arith.divf %48, %51 : vector<2x8x8xf32>
    %53 = vector.shape_cast %52 : vector<2x8x8xf32> to vector<16x8xf32>
    %c0_30 = arith.constant 0 : index
    %c0_31 = arith.constant 0 : index
    %c0_32 = arith.constant 0 : index
    %54 = vector.load %arg8[%c0_30, %c0_31, %c0_32] : memref<4x8x32xf32, #tpu.memory_space<vmem>>, vector<1x8x32xf32>
    %55 = vector.shape_cast %54 : vector<1x8x32xf32> to vector<8x32xf32>
    %cst_33 = arith.constant dense<0.000000e+00> : vector<16x32xf32>
    %56 = tpu.matmul %53, %55, %cst_33 {dimension_numbers = #tpu.dot_dimension_numbers<[1], [0], [0], [1], [0, 0, 1, 1], [], []>} : vector<16x8xf32>, vector<8x32xf32>, vector<16x32xf32> -> vector<16x32xf32>
    %57 = arith.addf %25, %56 : vector<16x32xf32>
    %58 = vector.extract_strided_slice %10 {offsets = [0, 0, 1], sizes = [2, 8, 1], strides = [1, 1, 1]} : vector<2x8x4xf32> to vector<2x8x1xf32>
    %59 = vector.extract_strided_slice %13 {offsets = [0, 1, 0], sizes = [2, 1, 8], strides = [1, 1, 1]} : vector<2x4x8xf32> to vector<2x1x8xf32>
    %60 = vector.broadcast %58 : vector<2x8x1xf32> to vector<2x8x8xf32>
    %61 = vector.broadcast %59 : vector<2x1x8xf32> to vector<2x8x8xf32>
    %62 = arith.addf %60, %61 : vector<2x8x8xf32>
    %c1_34 = arith.constant 1 : index
    %c1_35 = arith.constant 1 : index
    %63 = memref.load %arg9[%c1_34, %c1_35] : memref<2x4xf32, #tpu.memory_space<smem>>
    %64 = vector.broadcast %63 : f32 to vector<2x8x8xf32>
    %65 = arith.addf %62, %64 : vector<2x8x8xf32>
    %c0_36 = arith.constant 0 : index
    %c1_37 = arith.constant 1 : index
    %66 = memref.load %arg9[%c0_36, %c1_37] : memref<2x4xf32, #tpu.memory_space<smem>>
    %67 = vector.broadcast %66 : f32 to vector<2x8x8xf32>
    %68 = arith.mulf %67, %19 : vector<2x8x8xf32>
    %69 = arith.addf %65, %68 : vector<2x8x8xf32>
    %cst_38 = arith.constant 0.000000e+00 : f32
    %70 = vector.broadcast %cst_38 : f32 to vector<2x8x8xf32>
    %71 = arith.cmpf ogt, %69, %70 : vector<2x8x8xf32>
    %cst_39 = arith.constant 2.000000e-01 : f32
    %72 = vector.broadcast %cst_39 : f32 to vector<2x8x8xf32>
    %73 = arith.mulf %72, %69 : vector<2x8x8xf32>
    %74 = arith.select %71, %69, %73 : vector<2x8x8xi1>, vector<2x8x8xf32>
    %75 = arith.addf %74, %24 : vector<2x8x8xf32>
    %cst_40 = arith.constant dense<0xFF800000> : vector<2x8xf32>
    %76 = vector.multi_reduction <maximumf>, %75, %cst_40 [1] : vector<2x8x8xf32> to vector<2x8xf32>
    %77 = vector.shape_cast %76 : vector<2x8xf32> to vector<2x1x8xf32>
    %78 = vector.broadcast %77 : vector<2x1x8xf32> to vector<2x8x8xf32>
    %79 = arith.subf %75, %78 : vector<2x8x8xf32>
    %80 = math.exp %79 : vector<2x8x8xf32>
    %cst_41 = arith.constant dense<0.000000e+00> : vector<2x8xf32>
    %81 = vector.multi_reduction <add>, %80, %cst_41 [1] : vector<2x8x8xf32> to vector<2x8xf32>
    %82 = vector.shape_cast %81 : vector<2x8xf32> to vector<2x1x8xf32>
    %83 = vector.broadcast %82 : vector<2x1x8xf32> to vector<2x8x8xf32>
    %84 = arith.divf %80, %83 : vector<2x8x8xf32>
    %85 = vector.shape_cast %84 : vector<2x8x8xf32> to vector<16x8xf32>
    %c1_42 = arith.constant 1 : index
    %c0_43 = arith.constant 0 : index
    %c0_44 = arith.constant 0 : index
    %86 = vector.load %arg8[%c1_42, %c0_43, %c0_44] : memref<4x8x32xf32, #tpu.memory_space<vmem>>, vector<1x8x32xf32>
    %87 = vector.shape_cast %86 : vector<1x8x32xf32> to vector<8x32xf32>
    %cst_45 = arith.constant dense<0.000000e+00> : vector<16x32xf32>
    %88 = tpu.matmul %85, %87, %cst_45 {dimension_numbers = #tpu.dot_dimension_numbers<[1], [0], [0], [1], [0, 0, 1, 1], [], []>} : vector<16x8xf32>, vector<8x32xf32>, vector<16x32xf32> -> vector<16x32xf32>
    %89 = arith.addf %57, %88 : vector<16x32xf32>
    %90 = vector.extract_strided_slice %10 {offsets = [0, 0, 2], sizes = [2, 8, 1], strides = [1, 1, 1]} : vector<2x8x4xf32> to vector<2x8x1xf32>
    %91 = vector.extract_strided_slice %13 {offsets = [0, 2, 0], sizes = [2, 1, 8], strides = [1, 1, 1]} : vector<2x4x8xf32> to vector<2x1x8xf32>
    %92 = vector.broadcast %90 : vector<2x8x1xf32> to vector<2x8x8xf32>
    %93 = vector.broadcast %91 : vector<2x1x8xf32> to vector<2x8x8xf32>
    %94 = arith.addf %92, %93 : vector<2x8x8xf32>
    %c1_46 = arith.constant 1 : index
    %c2 = arith.constant 2 : index
    %95 = memref.load %arg9[%c1_46, %c2] : memref<2x4xf32, #tpu.memory_space<smem>>
    %96 = vector.broadcast %95 : f32 to vector<2x8x8xf32>
    %97 = arith.addf %94, %96 : vector<2x8x8xf32>
    %c0_47 = arith.constant 0 : index
    %c2_48 = arith.constant 2 : index
    %98 = memref.load %arg9[%c0_47, %c2_48] : memref<2x4xf32, #tpu.memory_space<smem>>
    %99 = vector.broadcast %98 : f32 to vector<2x8x8xf32>
    %100 = arith.mulf %99, %19 : vector<2x8x8xf32>
    %101 = arith.addf %97, %100 : vector<2x8x8xf32>
    %cst_49 = arith.constant 0.000000e+00 : f32
    %102 = vector.broadcast %cst_49 : f32 to vector<2x8x8xf32>
    %103 = arith.cmpf ogt, %101, %102 : vector<2x8x8xf32>
    %cst_50 = arith.constant 2.000000e-01 : f32
    %104 = vector.broadcast %cst_50 : f32 to vector<2x8x8xf32>
    %105 = arith.mulf %104, %101 : vector<2x8x8xf32>
    %106 = arith.select %103, %101, %105 : vector<2x8x8xi1>, vector<2x8x8xf32>
    %107 = arith.addf %106, %24 : vector<2x8x8xf32>
    %cst_51 = arith.constant dense<0xFF800000> : vector<2x8xf32>
    %108 = vector.multi_reduction <maximumf>, %107, %cst_51 [1] : vector<2x8x8xf32> to vector<2x8xf32>
    %109 = vector.shape_cast %108 : vector<2x8xf32> to vector<2x1x8xf32>
    %110 = vector.broadcast %109 : vector<2x1x8xf32> to vector<2x8x8xf32>
    %111 = arith.subf %107, %110 : vector<2x8x8xf32>
    %112 = math.exp %111 : vector<2x8x8xf32>
    %cst_52 = arith.constant dense<0.000000e+00> : vector<2x8xf32>
    %113 = vector.multi_reduction <add>, %112, %cst_52 [1] : vector<2x8x8xf32> to vector<2x8xf32>
    %114 = vector.shape_cast %113 : vector<2x8xf32> to vector<2x1x8xf32>
    %115 = vector.broadcast %114 : vector<2x1x8xf32> to vector<2x8x8xf32>
    %116 = arith.divf %112, %115 : vector<2x8x8xf32>
    %117 = vector.shape_cast %116 : vector<2x8x8xf32> to vector<16x8xf32>
    %c2_53 = arith.constant 2 : index
    %c0_54 = arith.constant 0 : index
    %c0_55 = arith.constant 0 : index
    %118 = vector.load %arg8[%c2_53, %c0_54, %c0_55] : memref<4x8x32xf32, #tpu.memory_space<vmem>>, vector<1x8x32xf32>
    %119 = vector.shape_cast %118 : vector<1x8x32xf32> to vector<8x32xf32>
    %cst_56 = arith.constant dense<0.000000e+00> : vector<16x32xf32>
    %120 = tpu.matmul %117, %119, %cst_56 {dimension_numbers = #tpu.dot_dimension_numbers<[1], [0], [0], [1], [0, 0, 1, 1], [], []>} : vector<16x8xf32>, vector<8x32xf32>, vector<16x32xf32> -> vector<16x32xf32>
    %121 = arith.addf %89, %120 : vector<16x32xf32>
    %122 = vector.extract_strided_slice %10 {offsets = [0, 0, 3], sizes = [2, 8, 1], strides = [1, 1, 1]} : vector<2x8x4xf32> to vector<2x8x1xf32>
    %123 = vector.extract_strided_slice %13 {offsets = [0, 3, 0], sizes = [2, 1, 8], strides = [1, 1, 1]} : vector<2x4x8xf32> to vector<2x1x8xf32>
    %124 = vector.broadcast %122 : vector<2x8x1xf32> to vector<2x8x8xf32>
    %125 = vector.broadcast %123 : vector<2x1x8xf32> to vector<2x8x8xf32>
    %126 = arith.addf %124, %125 : vector<2x8x8xf32>
    %c1_57 = arith.constant 1 : index
    %c3 = arith.constant 3 : index
    %127 = memref.load %arg9[%c1_57, %c3] : memref<2x4xf32, #tpu.memory_space<smem>>
    %128 = vector.broadcast %127 : f32 to vector<2x8x8xf32>
    %129 = arith.addf %126, %128 : vector<2x8x8xf32>
    %c0_58 = arith.constant 0 : index
    %c3_59 = arith.constant 3 : index
    %130 = memref.load %arg9[%c0_58, %c3_59] : memref<2x4xf32, #tpu.memory_space<smem>>
    %131 = vector.broadcast %130 : f32 to vector<2x8x8xf32>
    %132 = arith.mulf %131, %19 : vector<2x8x8xf32>
    %133 = arith.addf %129, %132 : vector<2x8x8xf32>
    %cst_60 = arith.constant 0.000000e+00 : f32
    %134 = vector.broadcast %cst_60 : f32 to vector<2x8x8xf32>
    %135 = arith.cmpf ogt, %133, %134 : vector<2x8x8xf32>
    %cst_61 = arith.constant 2.000000e-01 : f32
    %136 = vector.broadcast %cst_61 : f32 to vector<2x8x8xf32>
    %137 = arith.mulf %136, %133 : vector<2x8x8xf32>
    %138 = arith.select %135, %133, %137 : vector<2x8x8xi1>, vector<2x8x8xf32>
    %139 = arith.addf %138, %24 : vector<2x8x8xf32>
    %cst_62 = arith.constant dense<0xFF800000> : vector<2x8xf32>
    %140 = vector.multi_reduction <maximumf>, %139, %cst_62 [1] : vector<2x8x8xf32> to vector<2x8xf32>
    %141 = vector.shape_cast %140 : vector<2x8xf32> to vector<2x1x8xf32>
    %142 = vector.broadcast %141 : vector<2x1x8xf32> to vector<2x8x8xf32>
    %143 = arith.subf %139, %142 : vector<2x8x8xf32>
    %144 = math.exp %143 : vector<2x8x8xf32>
    %cst_63 = arith.constant dense<0.000000e+00> : vector<2x8xf32>
    %145 = vector.multi_reduction <add>, %144, %cst_63 [1] : vector<2x8x8xf32> to vector<2x8xf32>
    %146 = vector.shape_cast %145 : vector<2x8xf32> to vector<2x1x8xf32>
    %147 = vector.broadcast %146 : vector<2x1x8xf32> to vector<2x8x8xf32>
    %148 = arith.divf %144, %147 : vector<2x8x8xf32>
    %149 = vector.shape_cast %148 : vector<2x8x8xf32> to vector<16x8xf32>
    %c3_64 = arith.constant 3 : index
    %c0_65 = arith.constant 0 : index
    %c0_66 = arith.constant 0 : index
    %150 = vector.load %arg8[%c3_64, %c0_65, %c0_66] : memref<4x8x32xf32, #tpu.memory_space<vmem>>, vector<1x8x32xf32>
    %151 = vector.shape_cast %150 : vector<1x8x32xf32> to vector<8x32xf32>
    %cst_67 = arith.constant dense<0.000000e+00> : vector<16x32xf32>
    %152 = tpu.matmul %149, %151, %cst_67 {dimension_numbers = #tpu.dot_dimension_numbers<[1], [0], [0], [1], [0, 0, 1, 1], [], []>} : vector<16x8xf32>, vector<8x32xf32>, vector<16x32xf32> -> vector<16x32xf32>
    %153 = arith.addf %121, %152 : vector<16x32xf32>
    %154 = vector.shape_cast %153 : vector<16x32xf32> to vector<2x8x32xf32>
    %cst_68 = arith.constant dense<0.000000e+00> : vector<2x8x32xf32>
    %155 = tpu.matmul %154, %18, %cst_68 {dimension_numbers = #tpu.dot_dimension_numbers<[2], [1], [1], [2], [0, 0, 0, 1, 1, 2], [0], [0]>} : vector<2x8x32xf32>, vector<2x32x32xf32>, vector<2x8x32xf32> -> vector<2x8x32xf32>
    %cst_69 = arith.constant 2.500000e-01 : f32
    %156 = vector.broadcast %cst_69 : f32 to vector<2x8x32xf32>
    %157 = arith.mulf %155, %156 : vector<2x8x32xf32>
    %cst_70 = arith.constant 0.000000e+00 : f32
    %158 = vector.broadcast %cst_70 : f32 to vector<2x8x32xf32>
    %159 = arith.maximumf %157, %158 : vector<2x8x32xf32>
    %c0_71 = arith.constant 0 : index
    %c0_72 = arith.constant 0 : index
    %c0_73 = arith.constant 0 : index
    %160 = vector.load %arg10[%c0_71, %c0_72, %c0_73] : memref<2x8x32xf32, #tpu.memory_space<vmem>>, vector<2x8x32xf32>
    tpu.vector_store %arg10[%c0_71, %c0_72, %c0_73], %159 {strides = array<i32>} : memref<2x8x32xf32, #tpu.memory_space<vmem>>, vector<2x8x32xf32>,
    return
  }
  func.func @transform_0(%arg0: i32) -> (i32, i32, i32) {
    %c0_i32 = arith.constant 0 : i32
    %c0_i32_0 = arith.constant 0 : i32
    %c0_i32_1 = arith.constant 0 : i32
    return %arg0, %c0_i32, %c0_i32_0 : i32, i32, i32
  }
  func.func @transform_1(%arg0: i32) -> (i32, i32, i32) {
    %c0_i32 = arith.constant 0 : i32
    %c0_i32_0 = arith.constant 0 : i32
    %c0_i32_1 = arith.constant 0 : i32
    return %arg0, %c0_i32, %c0_i32_0 : i32, i32, i32
  }
  func.func @transform_2(%arg0: i32) -> (i32, i32) {
    %c0_i32 = arith.constant 0 : i32
    %c0_i32_0 = arith.constant 0 : i32
    %c0_i32_1 = arith.constant 0 : i32
    return %c0_i32, %c0_i32_0 : i32, i32
  }
  func.func @transform_3(%arg0: i32) -> (i32, i32) {
    %c0_i32 = arith.constant 0 : i32
    %c0_i32_0 = arith.constant 0 : i32
    %c0_i32_1 = arith.constant 0 : i32
    return %c0_i32, %c0_i32_0 : i32, i32
  }
  func.func @transform_4(%arg0: i32) -> (i32, i32) {
    %c0_i32 = arith.constant 0 : i32
    %c0_i32_0 = arith.constant 0 : i32
    %c0_i32_1 = arith.constant 0 : i32
    return %c0_i32, %c0_i32_0 : i32, i32
  }
  func.func @transform_5(%arg0: i32) -> (i32, i32, i32) {
    %c0_i32 = arith.constant 0 : i32
    %c0_i32_0 = arith.constant 0 : i32
    %c0_i32_1 = arith.constant 0 : i32
    return %arg0, %c0_i32, %c0_i32_0 : i32, i32, i32
  }
  func.func @transform_6(%arg0: i32) -> (i32, i32, i32) {
    %c0_i32 = arith.constant 0 : i32
    %c0_i32_0 = arith.constant 0 : i32
    %c0_i32_1 = arith.constant 0 : i32
    return %arg0, %c0_i32, %c0_i32_0 : i32, i32, i32
  }
  func.func @transform_7(%arg0: i32) -> (i32, i32, i32) {
    %c0_i32 = arith.constant 0 : i32
    %c0_i32_0 = arith.constant 0 : i32
    %c0_i32_1 = arith.constant 0 : i32
    %c0_i32_2 = arith.constant 0 : i32
    return %c0_i32, %c0_i32_0, %c0_i32_1 : i32, i32, i32
  }
  func.func @transform_8(%arg0: i32) -> (i32, i32) {
    %c0_i32 = arith.constant 0 : i32
    %c0_i32_0 = arith.constant 0 : i32
    %c0_i32_1 = arith.constant 0 : i32
    return %c0_i32, %c0_i32_0 : i32, i32
  }
  func.func @transform_9(%arg0: i32) -> (i32, i32, i32) {
    %c0_i32 = arith.constant 0 : i32
    %c0_i32_0 = arith.constant 0 : i32
    %c0_i32_1 = arith.constant 0 : i32
    return %arg0, %c0_i32, %c0_i32_0 : i32, i32, i32
  }
}

</mosaic_0001>

<llo_original>
// kernel: tpu_custom_call.1
$region0: #{tpu_custom_call.1}
  #allocation0 [shape = 'u32[]', space=smem, size = 0x4, offset = 0x4, fixed_abs, tag = 'smem constant byte address 0x4 - core index']
  #allocation1 [shape = 'u32[144,128]{1,0:T(1,128)}', space=vmem, size = 0x12000, scoped, tag = 'internal scratch']
  %s0 = inlined_call_operand.vmem [shape: f32[2,8,32], index: 0, kind: input, shape index: {}]
  %s1 = inlined_call_operand.vmem [shape: f32[2,32,8], index: 1, kind: input, shape index: {}]
  %s2 = inlined_call_operand.vmem [shape: f32[32,128], index: 2, kind: input, shape index: {}]
  %s3 = inlined_call_operand.vmem [shape: f32[1,128], index: 3, kind: input, shape index: {}]
  %s4 = inlined_call_operand.vmem [shape: f32[128,4], index: 4, kind: input, shape index: {}]
  %s5 = inlined_call_operand.vmem [shape: f32[2,4,32], index: 5, kind: input, shape index: {}]
  %s6 = inlined_call_operand.vmem [shape: f32[2,8,8], index: 6, kind: input, shape index: {}]
  %s7 = inlined_call_operand.vmem [shape: f32[4,8,32], index: 7, kind: input, shape index: {}]
  %s8 = inlined_call_operand.vmem [shape: f32[2,4], index: 8, kind: input, shape index: {}]
  %s9 = inlined_call_operand.hbm [shape: f32[2,8,32], index: 9, kind: output, shape index: {}]
  %s10 = sld [smem:[#allocation0]]
  $region50: #{tpu_custom_call.1} parent=0
    _
  %s12 = ssub.s32 1, %s10
  %s13 = scalar_select 0, %s12, %s10
  $region1: #{tpu_custom_call.1} parent=0
    #allocation2 [shape = 'u8[1024]{0}', space=smem, size = 0x400, scoped, tag = 'input window, operand 8, single buffered']
    #allocation3 [shape = 's32[1]{0}', space=sflag, size = 0x4, scoped, tag = 'scoped memory for tpu_custom_call.1']
    #allocation4 [shape = 's32[1]{0}', space=sflag, size = 0x4, scoped, tag = 'scoped memory for tpu_custom_call.1']
    #allocation5 [shape = 'u8[8192]{0}', space=vmem, size = 0x2000, scoped, tag = 'output window, operand 0, single buffered']
    %14 = vsyncpa [#allocation4], 0
    %15 = vsyncpa [#allocation3], 0
    // Predicated region
    $region2: #{tpu_custom_call.1} parent=1 // pred_check
      _
    $region3: #{tpu_custom_call.1} parent=1 // pred_check_branch
      %17 = sbr.rel (0) target = $region5
    $region4: #{tpu_custom_call.1} parent=1 // pred_region
      _
    $region5: #{tpu_custom_call.1} parent=1 // pred_fallthru
      _
    // Predicated region
    $region6: #{tpu_custom_call.1} parent=1 // pred_check
      _
    $region7: #{tpu_custom_call.1} parent=1 // pred_check_branch
      %19 = sbr.rel (0) target = $region9
    $region8: #{tpu_custom_call.1} parent=1 // pred_region
      _
    $region9: #{tpu_custom_call.1} parent=1 // pred_fallthru
      _
    // Predicated region
    $region10: #{tpu_custom_call.1} parent=1 // pred_check
      _
    $region11: #{tpu_custom_call.1} parent=1 // pred_check_branch
      %21 = sbr.rel (0) target = $region13
    $region12: #{tpu_custom_call.1} parent=1 // pred_region
      _
    $region13: #{tpu_custom_call.1} parent=1 // pred_fallthru
      _
    // Predicated region
    $region14: #{tpu_custom_call.1} parent=1 // pred_check
      _
    $region15: #{tpu_custom_call.1} parent=1 // pred_check_branch
      %23 = sbr.rel (0) target = $region17
    $region16: #{tpu_custom_call.1} parent=1 // pred_region
      _
    $region17: #{tpu_custom_call.1} parent=1 // pred_fallthru
      _
    // Predicated region
    $region18: #{tpu_custom_call.1} parent=1 // pred_check
      _
    $region19: #{tpu_custom_call.1} parent=1 // pred_check_branch
      %25 = sbr.rel (0) target = $region21
    $region20: #{tpu_custom_call.1} parent=1 // pred_region
      _
    $region21: #{tpu_custom_call.1} parent=1 // pred_fallthru
      _
    // Predicated region
    $region22: #{tpu_custom_call.1} parent=1 // pred_check
      _
    $region23: #{tpu_custom_call.1} parent=1 // pred_check_branch
      %27 = sbr.rel (0) target = $region25
    $region24: #{tpu_custom_call.1} parent=1 // pred_region
      _
    $region25: #{tpu_custom_call.1} parent=1 // pred_fallthru
      _
    // Predicated region
    $region26: #{tpu_custom_call.1} parent=1 // pred_check
      _
    $region27: #{tpu_custom_call.1} parent=1 // pred_check_branch
      %29 = sbr.rel (0) target = $region29
    $region28: #{tpu_custom_call.1} parent=1 // pred_region
      _
    $region29: #{tpu_custom_call.1} parent=1 // pred_fallthru
      _
    // Predicated region
    $region30: #{tpu_custom_call.1} parent=1 // pred_check
      _
    $region31: #{tpu_custom_call.1} parent=1 // pred_check_branch
      %31 = sbr.rel (0) target = $region33
    $region32: #{tpu_custom_call.1} parent=1 // pred_region
      _
    $region33: #{tpu_custom_call.1} parent=1 // pred_fallthru
      _
    // Predicated region
    $region34: #{tpu_custom_call.1} parent=1 // pred_check
      _
    $region35: #{tpu_custom_call.1} parent=1 // pred_check_branch
      %33 = sbr.rel (0) target = $region37
    $region36: #{tpu_custom_call.1} parent=1 // pred_region
      %s35 = ssub.s32 32, 32
      %36 = vsyncadd [#allocation4], %s35
      %s38 = sshll.u32 %s8, 4
      %s39 = int_to_ptr.vmem [resolvable:$true] %s38
      %41 = dma.vmem_to_smem %s39, 32, [#allocation2], [#allocation4]
    $region37: #{tpu_custom_call.1} parent=1 // pred_fallthru
      _
    // Predicated region
    $region38: #{tpu_custom_call.1} parent=1 // pred_check
      _
    $region39: #{tpu_custom_call.1} parent=1 // pred_check_branch
      %43 = sbr.rel (0) target = $region41
    $region40: #{tpu_custom_call.1} parent=1 // pred_region
      %44 = dma.done [#allocation4], 32
    $region41: #{tpu_custom_call.1} parent=1 // pred_fallthru
      _
    %45 = sfence
    %v46 = vld [vmem:[%s0] sm:$0xff]
    %v47 = vld [vmem:[%s0 + $0x8] sm:$0xff]
    %v48 = vld [vmem:[%s2] sm:$0xff]
    %v49 = vld [vmem:[%s2 + $0x8] sm:$0xff]
    %v50 = vld [vmem:[%s2 + $0x10] sm:$0xff]
    %v51 = vld [vmem:[%s2 + $0x18] sm:$0xff]
    %v52 = vld [vmem:[%s3] sm:$0x1]
    %v54 = vlaneseq
    %v55 = vshrl.u32 %v54, 7
    %v56 = vsub.s32 0, %v55
    %v57 = vrot.slane %v52, %v56
    %vm59 = vcmask 261120
    %v61 = vsel %vm59, %v46, 0
    %v64 = vsel %vm59, %v47, 0
    %66 = vmatprep.subr.mxu0 0.0
    %67 = vmatpush1.msra.mxu0 %v48
    %68 = vmatprep.subr.mxu0 0.0
    %69 = vmatpush1.msra.mxu0 %v49
    %70 = vmatprep.subr.mxu0 0.0
    %71 = vmatpush1.msra.mxu0 %v50
    %72 = vmatprep.subr.mxu0 0.0
    %73 = vmatpush1.msra.mxu0 %v51
    %74 = vmatprep.subr.mxu0 0.0
    %75 = vmatpush1.msra.mxu0 0.0
    %76 = vmatprep.subr.mxu0 0.0
    %77 = vmatpush1.msra.mxu0 0.0
    %78 = vmatprep.subr.mxu0 0.0
    %79 = vmatpush1.msra.mxu0 0.0
    %80 = vmatprep.subr.mxu0 0.0
    %81 = vmatpush1.msra.mxu0 0.0
    %82 = vmatprep.subr.mxu0 0.0
    %83 = vmatpush1.msra.mxu0 0.0
    %84 = vmatprep.subr.mxu0 0.0
    %85 = vmatpush1.msra.mxu0 0.0
    %86 = vmatprep.subr.mxu0 0.0
    %87 = vmatpush1.msra.mxu0 0.0
    %88 = vmatprep.subr.mxu0 0.0
    %89 = vmatpush1.msra.mxu0 0.0
    %90 = vmatprep.subr.mxu0 0.0
    %91 = vmatpush1.msra.mxu0 0.0
    %92 = vmatprep.subr.mxu0 0.0
    %93 = vmatpush1.msra.mxu0 0.0
    %94 = vmatprep.subr.mxu0 0.0
    %95 = vmatpush1.msra.mxu0 0.0
    %96 = vmatprep.subr.mxu0 0.0
    %97 = vmatpush1.msra.mxu0 0.0
    %98 = vmatprep.subr.mxu0 0.0
    %99 = vmatpush1.msra.mxu0 0.0
    %100 = vmatprep.subr.mxu0 0.0
    %101 = vmatpush1.msra.mxu0 0.0
    %102 = vmatprep.subr.mxu0 0.0
    %103 = vmatpush1.msra.mxu0 0.0
    %104 = vmatprep.subr.mxu0 0.0
    %105 = vmatpush1.msra.mxu0 0.0
    %106 = vmatprep.subr.mxu0 0.0
    %107 = vmatpush1.msra.mxu0 0.0
    %108 = vmatprep.subr.mxu0 0.0
    %109 = vmatpush1.msra.mxu0 0.0
    %110 = vmatprep.subr.mxu0 0.0
    %111 = vmatpush1.msra.mxu0 0.0
    %112 = vmatprep.subr.mxu0 0.0
    %113 = vmatpush1.msra.mxu0 0.0
    %114 = vmatprep.subr.mxu0 0.0
    %115 = vmatpush1.msra.mxu0 0.0
    %116 = vmatprep.subr.mxu0 0.0
    %117 = vmatpush1.msra.mxu0 0.0
    %118 = vmatprep.subr.mxu0 0.0
    %119 = vmatpush1.msra.mxu0 0.0
    %120 = vmatprep.subr.mxu0 0.0
    %121 = vmatpush1.msra.mxu0 0.0
    %122 = vmatprep.subr.mxu0 0.0
    %123 = vmatpush1.msra.mxu0 0.0
    %124 = vmatprep.subr.mxu0 0.0
    %125 = vmatpush1.msra.mxu0 0.0
    %126 = vmatprep.subr.mxu0 0.0
    %127 = vmatpush1.msra.mxu0 0.0
    %128 = vmatprep.subr.mxu0 0.0
    %129 = vmatpush1.msra.mxu0 0.0
    %130 = vmatprep.mubr.f32.mxu0 0.0
    %131 = vmatmul.mubr.f32.gmra.mrb[0].mxu0 %v61
    %v132 = vpop.f32.mrb[0].mxu0
    %v133 = vadd.f32 %v57, %v132
    %v134 = vpop.f32.mrb[0].mxu0
    %135 = vmatprep.mubr.f32.mxu0 0.0
    %136 = vmatmul.mubr.f32.gmra.mrb[0].mxu0 %v64
    %v137 = vpop.f32.mrb[0].mxu0
    %v138 = vadd.f32 %v57, %v137
    %v139 = vpop.f32.mrb[0].mxu0
    %140 = vdwg.mxu0
    %v141 = vld [vmem:[%s4] sm:$0xff]
    %v142 = vld [vmem:[%s4 + $0x8] sm:$0xff]
    %v143 = vld [vmem:[%s4 + $0x10] sm:$0xff]
    %v144 = vld [vmem:[%s4 + $0x18] sm:$0xff]
    %v145 = vld [vmem:[%s4 + $0x20] sm:$0xff]
    %v146 = vld [vmem:[%s4 + $0x28] sm:$0xff]
    %v147 = vld [vmem:[%s4 + $0x30] sm:$0xff]
    %v148 = vld [vmem:[%s4 + $0x38] sm:$0xff]
    %v149 = vld [vmem:[%s4 + $0x40] sm:$0xff]
    %v150 = vld [vmem:[%s4 + $0x48] sm:$0xff]
    %v151 = vld [vmem:[%s4 + $0x50] sm:$0xff]
    %v152 = vld [vmem:[%s4 + $0x58] sm:$0xff]
    %v153 = vld [vmem:[%s4 + $0x60] sm:$0xff]
    %v154 = vld [vmem:[%s4 + $0x68] sm:$0xff]
    %v155 = vld [vmem:[%s4 + $0x70] sm:$0xff]
    %v156 = vld [vmem:[%s4 + $0x78] sm:$0xff]
    %157 = vmatprep.subr.mxu0 0.0
    %158 = vmatpush1.msra.mxu0 %v141
    %159 = vmatprep.subr.mxu0 0.0
    %160 = vmatpush1.msra.mxu0 %v142
    %161 = vmatprep.subr.mxu0 0.0
    %162 = vmatpush1.msra.mxu0 %v143
    %163 = vmatprep.subr.mxu0 0.0
    %164 = vmatpush1.msra.mxu0 %v144
    %165 = vmatprep.subr.mxu0 0.0
    %166 = vmatpush1.msra.mxu0 %v145
    %167 = vmatprep.subr.mxu0 0.0
    %168 = vmatpush1.msra.mxu0 %v146
    %169 = vmatprep.subr.mxu0 0.0
    %170 = vmatpush1.msra.mxu0 %v147
    %171 = vmatprep.subr.mxu0 0.0
    %172 = vmatpush1.msra.mxu0 %v148
    %173 = vmatprep.subr.mxu0 0.0
    %174 = vmatpush1.msra.mxu0 %v149
    %175 = vmatprep.subr.mxu0 0.0
    %176 = vmatpush1.msra.mxu0 %v150
    %177 = vmatprep.subr.mxu0 0.0
    %178 = vmatpush1.msra.mxu0 %v151
    %179 = vmatprep.subr.mxu0 0.0
    %180 = vmatpush1.msra.mxu0 %v152
    %181 = vmatprep.subr.mxu0 0.0
    %182 = vmatpush1.msra.mxu0 %v153
    %183 = vmatprep.subr.mxu0 0.0
    %184 = vmatpush1.msra.mxu0 %v154
    %185 = vmatprep.subr.mxu0 0.0
    %186 = vmatpush1.msra.mxu0 %v155
    %187 = vmatprep.subr.mxu0 0.0
    %188 = vmatpush1.msra.mxu0 %v156
    %189 = vmatprep.subr.mxu0 0.0
    %190 = vmatpush1.msra.mxu0 0.0
    %191 = vmatprep.subr.mxu0 0.0
    %192 = vmatpush1.msra.mxu0 0.0
    %193 = vmatprep.subr.mxu0 0.0
    %194 = vmatpush1.msra.mxu0 0.0
    %195 = vmatprep.subr.mxu0 0.0
    %196 = vmatpush1.msra.mxu0 0.0
    %197 = vmatprep.subr.mxu0 0.0
    %198 = vmatpush1.msra.mxu0 0.0
    %199 = vmatprep.subr.mxu0 0.0
    %200 = vmatpush1.msra.mxu0 0.0
    %201 = vmatprep.subr.mxu0 0.0
    %202 = vmatpush1.msra.mxu0 0.0
    %203 = vmatprep.subr.mxu0 0.0
    %204 = vmatpush1.msra.mxu0 0.0
    %205 = vmatprep.subr.mxu0 0.0
    %206 = vmatpush1.msra.mxu0 0.0
    %207 = vmatprep.subr.mxu0 0.0
    %208 = vmatpush1.msra.mxu0 0.0
    %209 = vmatprep.subr.mxu0 0.0
    %210 = vmatpush1.msra.mxu0 0.0
    %211 = vmatprep.subr.mxu0 0.0
    %212 = vmatpush1.msra.mxu0 0.0
    %213 = vmatprep.subr.mxu0 0.0
    %214 = vmatpush1.msra.mxu0 0.0
    %215 = vmatprep.subr.mxu0 0.0
    %216 = vmatpush1.msra.mxu0 0.0
    %217 = vmatprep.subr.mxu0 0.0
    %218 = vmatpush1.msra.mxu0 0.0
    %219 = vmatprep.subr.mxu0 0.0
    %220 = vmatpush1.msra.mxu0 0.0
    %221 = vmatprep.mubr.f32.mxu0 0.0
    %222 = vmatmul.mubr.f32.gmra.mrb[0].mxu0 %v133
    %v223 = vpop.f32.mrb[0].mxu0
    %v224 = vadd.f32 0.0, %v223
    %v225 = vpop.f32.mrb[0].mxu0
    %226 = vmatprep.mubr.f32.mxu0 0.0
    %227 = vmatmul.mubr.f32.gmra.mrb[0].mxu0 %v138
    %v228 = vpop.f32.mrb[0].mxu0
    %v229 = vadd.f32 0.0, %v228
    %v230 = vpop.f32.mrb[0].mxu0
    %231 = vdwg.mxu0
    %v232 = vld [vmem:[%s5] sm:$0xf]
    %v233 = vld [vmem:[%s5 + $0x4] sm:$0xf]
    %v234 = vld [vmem:[%s1] sm:$0xff]
    %v235 = vld [vmem:[%s1 + $0x8] sm:$0xff]
    %v236 = vld [vmem:[%s1 + $0x10] sm:$0xff]
    %v237 = vld [vmem:[%s1 + $0x18] sm:$0xff]
    %v238 = vld [vmem:[%s1 + $0x20] sm:$0xff]
    %v239 = vld [vmem:[%s1 + $0x28] sm:$0xff]
    %v240 = vld [vmem:[%s1 + $0x30] sm:$0xff]
    %v241 = vld [vmem:[%s1 + $0x38] sm:$0xff]
    %v243 = vsel %vm59, %v232, 0
    %245 = vmatprep.subr.mxu0 0.0
    %246 = vmatpush1.msra.mxu0 %v234
    %247 = vmatprep.subr.mxu0 0.0
    %248 = vmatpush1.msra.mxu0 %v235
    %249 = vmatprep.subr.mxu0 0.0
    %250 = vmatpush1.msra.mxu0 %v236
    %251 = vmatprep.subr.mxu0 0.0
    %252 = vmatpush1.msra.mxu0 %v237
    %253 = vmatprep.subr.mxu0 0.0
    %254 = vmatpush1.msra.mxu0 0.0
    %255 = vmatprep.subr.mxu0 0.0
    %256 = vmatpush1.msra.mxu0 0.0
    %257 = vmatprep.subr.mxu0 0.0
    %258 = vmatpush1.msra.mxu0 0.0
    %259 = vmatprep.subr.mxu0 0.0
    %260 = vmatpush1.msra.mxu0 0.0
    %261 = vmatprep.subr.mxu0 0.0
    %262 = vmatpush1.msra.mxu0 0.0
    %263 = vmatprep.subr.mxu0 0.0
    %264 = vmatpush1.msra.mxu0 0.0
    %265 = vmatprep.subr.mxu0 0.0
    %266 = vmatpush1.msra.mxu0 0.0
    %267 = vmatprep.subr.mxu0 0.0
    %268 = vmatpush1.msra.mxu0 0.0
    %269 = vmatprep.subr.mxu0 0.0
    %270 = vmatpush1.msra.mxu0 0.0
    %271 = vmatprep.subr.mxu0 0.0
    %272 = vmatpush1.msra.mxu0 0.0
    %273 = vmatprep.subr.mxu0 0.0
    %274 = vmatpush1.msra.mxu0 0.0
    %275 = vmatprep.subr.mxu0 0.0
    %276 = vmatpush1.msra.mxu0 0.0
    %277 = vmatprep.subr.mxu0 0.0
    %278 = vmatpush1.msra.mxu0 0.0
    %279 = vmatprep.subr.mxu0 0.0
    %280 = vmatpush1.msra.mxu0 0.0
    %281 = vmatprep.subr.mxu0 0.0
    %282 = vmatpush1.msra.mxu0 0.0
    %283 = vmatprep.subr.mxu0 0.0
    %284 = vmatpush1.msra.mxu0 0.0
    %285 = vmatprep.subr.mxu0 0.0
    %286 = vmatpush1.msra.mxu0 0.0
    %287 = vmatprep.subr.mxu0 0.0
    %288 = vmatpush1.msra.mxu0 0.0
    %289 = vmatprep.subr.mxu0 0.0
    %290 = vmatpush1.msra.mxu0 0.0
    %291 = vmatprep.subr.mxu0 0.0
    %292 = vmatpush1.msra.mxu0 0.0
    %293 = vmatprep.subr.mxu0 0.0
    %294 = vmatpush1.msra.mxu0 0.0
    %295 = vmatprep.subr.mxu0 0.0
    %296 = vmatpush1.msra.mxu0 0.0
    %297 = vmatprep.subr.mxu0 0.0
    %298 = vmatpush1.msra.mxu0 0.0
    %299 = vmatprep.subr.mxu0 0.0
    %300 = vmatpush1.msra.mxu0 0.0
    %301 = vmatprep.subr.mxu0 0.0
    %302 = vmatpush1.msra.mxu0 0.0
    %303 = vmatprep.subr.mxu0 0.0
    %304 = vmatpush1.msra.mxu0 0.0
    %305 = vmatprep.subr.mxu0 0.0
    %306 = vmatpush1.msra.mxu0 0.0
    %307 = vmatprep.subr.mxu0 0.0
    %308 = vmatpush1.msra.mxu0 0.0
    %309 = vmatprep.mubr.f32.mxu0 0.0
    %310 = vmatmul.mubr.f32.gmra.mrb[0].mxu0 %v243
    %v311 = vpop.f32.mrb[0].mxu0
    %v312 = vadd.f32 0.0, %v311
    %v313 = vpop.f32.mrb[0].mxu0
    %314 = vdwg.mxu0
    %v316 = vsel %vm59, %v233, 0
    %318 = vmatprep.subr.mxu0 0.0
    %319 = vmatpush1.msra.mxu0 %v238
    %320 = vmatprep.subr.mxu0 0.0
    %321 = vmatpush1.msra.mxu0 %v239
    %322 = vmatprep.subr.mxu0 0.0
    %323 = vmatpush1.msra.mxu0 %v240
    %324 = vmatprep.subr.mxu0 0.0
    %325 = vmatpush1.msra.mxu0 %v241
    %326 = vmatprep.subr.mxu0 0.0
    %327 = vmatpush1.msra.mxu0 0.0
    %328 = vmatprep.subr.mxu0 0.0
    %329 = vmatpush1.msra.mxu0 0.0
    %330 = vmatprep.subr.mxu0 0.0
    %331 = vmatpush1.msra.mxu0 0.0
    %332 = vmatprep.subr.mxu0 0.0
    %333 = vmatpush1.msra.mxu0 0.0
    %334 = vmatprep.subr.mxu0 0.0
    %335 = vmatpush1.msra.mxu0 0.0
    %336 = vmatprep.subr.mxu0 0.0
    %337 = vmatpush1.msra.mxu0 0.0
    %338 = vmatprep.subr.mxu0 0.0
    %339 = vmatpush1.msra.mxu0 0.0
    %340 = vmatprep.subr.mxu0 0.0
    %341 = vmatpush1.msra.mxu0 0.0
    %342 = vmatprep.subr.mxu0 0.0
    %343 = vmatpush1.msra.mxu0 0.0
    %344 = vmatprep.subr.mxu0 0.0
    %345 = vmatpush1.msra.mxu0 0.0
    %346 = vmatprep.subr.mxu0 0.0
    %347 = vmatpush1.msra.mxu0 0.0
    %348 = vmatprep.subr.mxu0 0.0
    %349 = vmatpush1.msra.mxu0 0.0
    %350 = vmatprep.subr.mxu0 0.0
    %351 = vmatpush1.msra.mxu0 0.0
    %352 = vmatprep.subr.mxu0 0.0
    %353 = vmatpush1.msra.mxu0 0.0
    %354 = vmatprep.subr.mxu0 0.0
    %355 = vmatpush1.msra.mxu0 0.0
    %356 = vmatprep.subr.mxu0 0.0
    %357 = vmatpush1.msra.mxu0 0.0
    %358 = vmatprep.subr.mxu0 0.0
    %359 = vmatpush1.msra.mxu0 0.0
    %360 = vmatprep.subr.mxu0 0.0
    %361 = vmatpush1.msra.mxu0 0.0
    %362 = vmatprep.subr.mxu0 0.0
    %363 = vmatpush1.msra.mxu0 0.0
    %364 = vmatprep.subr.mxu0 0.0
    %365 = vmatpush1.msra.mxu0 0.0
    %366 = vmatprep.subr.mxu0 0.0
    %367 = vmatpush1.msra.mxu0 0.0
    %368 = vmatprep.subr.mxu0 0.0
    %369 = vmatpush1.msra.mxu0 0.0
    %370 = vmatprep.subr.mxu0 0.0
    %371 = vmatpush1.msra.mxu0 0.0
    %372 = vmatprep.subr.mxu0 0.0
    %373 = vmatpush1.msra.mxu0 0.0
    %374 = vmatprep.subr.mxu0 0.0
    %375 = vmatpush1.msra.mxu0 0.0
    %376 = vmatprep.subr.mxu0 0.0
    %377 = vmatpush1.msra.mxu0 0.0
    %378 = vmatprep.subr.mxu0 0.0
    %379 = vmatpush1.msra.mxu0 0.0
    %380 = vmatprep.subr.mxu0 0.0
    %381 = vmatpush1.msra.mxu0 0.0
    %382 = vmatprep.mubr.f32.mxu0 0.0
    %383 = vmatmul.mubr.f32.gmra.mrb[0].mxu0 %v316
    %v384 = vpop.f32.mrb[0].mxu0
    %v385 = vadd.f32 0.0, %v384
    %v386 = vpop.f32.mrb[0].mxu0
    %387 = vdwg.mxu0
    %390 = vrot.lane.b32.xlu0 %v133, 96
    %v391 = vpop.permute.xlu0 %390
    %392 = vrot.lane.b32.xlu0 %v138, 96
    %v393 = vpop.permute.xlu0 %392
    %396 = vrot.lane.b32.xlu0 %v133, 64
    %v397 = vpop.permute.xlu0 %396
    %398 = vrot.lane.b32.xlu0 %v138, 64
    %v399 = vpop.permute.xlu0 %398
    %402 = vrot.lane.b32.xlu0 %v133, 32
    %v403 = vpop.permute.xlu0 %402
    %404 = vrot.lane.b32.xlu0 %v138, 32
    %v405 = vpop.permute.xlu0 %404
    %v408 = vld [vmem:[%s6] sm:$0xff]
    %v409 = vld [vmem:[%s6 + $0x8] sm:$0xff]
    %vm410 = vcmp.eq.f32.partialorder %v408, 0.0
    %vm411 = vcmp.eq.f32.partialorder %v409, 0.0
    %v412 = vsel %vm410, -2.1474836e+09, 0.0
    %v413 = vsel %vm411, -2.1474836e+09, 0.0
    %415 = vset.pattern.permute.xlu0 0
    %416 = vperm.xlu0 %415, %v224
    %v417 = vpop.permute.xlu0 %416
    %420 = vset.pattern.permute.xlu0 0
    %421 = vperm.xlu0 %420, %v229
    %v422 = vpop.permute.xlu0 %421
    %v424 = vlaneseq
    %v425 = vshrl.u32 %v424, 7
    %v426 = vsub.s32 0, %v425
    %v427 = vrot.slane %v312, %v426
    %v428 = vlaneseq
    %v429 = vshrl.u32 %v428, 7
    %v430 = vsub.s32 0, %v429
    %v431 = vrot.slane %v385, %v430
    %v432 = vadd.f32 %v417, %v427
    %v433 = vadd.f32 %v422, %v431
    %s434 = sld [smem:[#allocation2 + $0x80]]
    %v435 = vstv %s434
    %v436 = vadd.f32 %v432, %v435
    %v437 = vadd.f32 %v433, %v435
    %s438 = sld [smem:[#allocation2]]
    %v439 = vstv %s438
    %v440 = vmul.f32 %v439, %v408
    %v441 = vmul.f32 %v439, %v409
    %v442 = vadd.f32 %v436, %v440
    %v443 = vadd.f32 %v437, %v441
    %vm444 = vcmp.gt.f32.partialorder %v442, 0.0
    %vm445 = vcmp.gt.f32.partialorder %v443, 0.0
    %v446 = vmul.f32 %v442, 0.2
    %v447 = vmul.f32 %v443, 0.2
    %v448 = vsel %vm444, %v442, %v446
    %v449 = vsel %vm445, %v443, %v447
    %v450 = vadd.f32 %v448, %v412
    %v451 = vadd.f32 %v449, %v413
    %vm452 = vcmask 64512
    %v453 = vsel %vm452, %v450, -inf
    %v454 = vrot.slane %v453, 4
    %v455 = vmax.f32 %v453, %v454
    %v456 = vrot.slane %v455, 2
    %v457 = vmax.f32 %v455, %v456
    %v458 = vrot.slane %v457, 1
    %v459 = vmax.f32 %v457, %v458
    %v460 = vsel %vm452, %v451, -inf
    %v461 = vrot.slane %v460, 4
    %v462 = vmax.f32 %v460, %v461
    %v463 = vrot.slane %v462, 2
    %v464 = vmax.f32 %v462, %v463
    %v465 = vrot.slane %v464, 1
    %v466 = vmax.f32 %v464, %v465
    %v467 = vsub.f32 %v450, %v459
    %v468 = vsub.f32 %v451, %v466
    %v469 = vmul.f32 %v467, 1.442695
    %v470 = vpow.pop %v469
    %v471 = vmul.f32 %v468, 1.442695
    %v472 = vpow.pop %v471
    %v473 = vsel %vm452, %v470, 0.0
    %v474 = vrot.slane %v473, 4
    %v475 = vadd.f32 %v473, %v474
    %v476 = vrot.slane %v475, 2
    %v477 = vadd.f32 %v475, %v476
    %v478 = vrot.slane %v477, 1
    %v479 = vadd.f32 %v477, %v478
    %v480 = vsel %vm452, %v472, 0.0
    %v481 = vrot.slane %v480, 4
    %v482 = vadd.f32 %v480, %v481
    %v483 = vrot.slane %v482, 2
    %v484 = vadd.f32 %v482, %v483
    %v485 = vrot.slane %v484, 1
    %v486 = vadd.f32 %v484, %v485
    %v487 = vrcp.pop %v479
    %v488 = vmul.f32 %v470, %v487
    %v489 = vrcp.pop %v486
    %v490 = vmul.f32 %v472, %v489
    %v491 = vld [vmem:[%s7] sm:$0xff]
    %492 = vset.pattern.permute.xlu0 1
    %493 = vperm.xlu0 %492, %v224
    %v494 = vpop.permute.xlu0 %493
    %496 = vset.pattern.permute.xlu0 1
    %497 = vperm.xlu0 %496, %v229
    %v498 = vpop.permute.xlu0 %497
    %v500 = vlaneseq
    %v501 = vshrl.u32 %v500, 7
    %v502 = vsub.s32 1, %v501
    %v503 = vrot.slane %v312, %v502
    %v504 = vlaneseq
    %v505 = vshrl.u32 %v504, 7
    %v506 = vsub.s32 1, %v505
    %v507 = vrot.slane %v385, %v506
    %v508 = vadd.f32 %v494, %v503
    %v509 = vadd.f32 %v498, %v507
    %s510 = sld [smem:[#allocation2 + $0x81]]
    %v511 = vstv %s510
    %v512 = vadd.f32 %v508, %v511
    %v513 = vadd.f32 %v509, %v511
    %s514 = sld [smem:[#allocation2 + $0x1]]
    %v515 = vstv %s514
    %v516 = vmul.f32 %v515, %v408
    %v517 = vmul.f32 %v515, %v409
    %v518 = vadd.f32 %v512, %v516
    %v519 = vadd.f32 %v513, %v517
    %vm520 = vcmp.gt.f32.partialorder %v518, 0.0
    %vm521 = vcmp.gt.f32.partialorder %v519, 0.0
    %v522 = vmul.f32 %v518, 0.2
    %v523 = vmul.f32 %v519, 0.2
    %v524 = vsel %vm520, %v518, %v522
    %v525 = vsel %vm521, %v519, %v523
    %v526 = vadd.f32 %v524, %v412
    %v527 = vadd.f32 %v525, %v413
    %v528 = vsel %vm452, %v526, -inf
    %v529 = vrot.slane %v528, 4
    %v530 = vmax.f32 %v528, %v529
    %v531 = vrot.slane %v530, 2
    %v532 = vmax.f32 %v530, %v531
    %v533 = vrot.slane %v532, 1
    %v534 = vmax.f32 %v532, %v533
    %v535 = vsel %vm452, %v527, -inf
    %v536 = vrot.slane %v535, 4
    %v537 = vmax.f32 %v535, %v536
    %v538 = vrot.slane %v537, 2
    %v539 = vmax.f32 %v537, %v538
    %v540 = vrot.slane %v539, 1
    %v541 = vmax.f32 %v539, %v540
    %v542 = vsub.f32 %v526, %v534
    %v543 = vsub.f32 %v527, %v541
    %v544 = vmul.f32 %v542, 1.442695
    %v545 = vpow.pop %v544
    %v546 = vmul.f32 %v543, 1.442695
    %v547 = vpow.pop %v546
    %v548 = vsel %vm452, %v545, 0.0
    %v549 = vrot.slane %v548, 4
    %v550 = vadd.f32 %v548, %v549
    %v551 = vrot.slane %v550, 2
    %v552 = vadd.f32 %v550, %v551
    %v553 = vrot.slane %v552, 1
    %v554 = vadd.f32 %v552, %v553
    %v555 = vsel %vm452, %v547, 0.0
    %v556 = vrot.slane %v555, 4
    %v557 = vadd.f32 %v555, %v556
    %v558 = vrot.slane %v557, 2
    %v559 = vadd.f32 %v557, %v558
    %v560 = vrot.slane %v559, 1
    %v561 = vadd.f32 %v559, %v560
    %v562 = vrcp.pop %v554
    %v563 = vmul.f32 %v545, %v562
    %v564 = vrcp.pop %v561
    %v565 = vmul.f32 %v547, %v564
    %s566 = scalar_lea.vmem %s7, 8
    %v567 = vld [vmem:[%s566] sm:$0xff]
    %v569 = vsel %vm452, %v563, 0
    %v572 = vsel %vm452, %v565, 0
    %574 = vmatprep.subr.mxu0 0.0
    %575 = vmatpush1.msra.mxu0 %v567
    %576 = vmatprep.subr.mxu0 0.0
    %577 = vmatpush1.msra.mxu0 0.0
    %578 = vmatprep.subr.mxu0 0.0
    %579 = vmatpush1.msra.mxu0 0.0
    %580 = vmatprep.subr.mxu0 0.0
    %581 = vmatpush1.msra.mxu0 0.0
    %582 = vmatprep.subr.mxu0 0.0
    %583 = vmatpush1.msra.mxu0 0.0
    %584 = vmatprep.subr.mxu0 0.0
    %585 = vmatpush1.msra.mxu0 0.0
    %586 = vmatprep.subr.mxu0 0.0
    %587 = vmatpush1.msra.mxu0 0.0
    %588 = vmatprep.subr.mxu0 0.0
    %589 = vmatpush1.msra.mxu0 0.0
    %590 = vmatprep.subr.mxu0 0.0
    %591 = vmatpush1.msra.mxu0 0.0
    %592 = vmatprep.subr.mxu0 0.0
    %593 = vmatpush1.msra.mxu0 0.0
    %594 = vmatprep.subr.mxu0 0.0
    %595 = vmatpush1.msra.mxu0 0.0
    %596 = vmatprep.subr.mxu0 0.0
    %597 = vmatpush1.msra.mxu0 0.0
    %598 = vmatprep.subr.mxu0 0.0
    %599 = vmatpush1.msra.mxu0 0.0
    %600 = vmatprep.subr.mxu0 0.0
    %601 = vmatpush1.msra.mxu0 0.0
    %602 = vmatprep.subr.mxu0 0.0
    %603 = vmatpush1.msra.mxu0 0.0
    %604 = vmatprep.subr.mxu0 0.0
    %605 = vmatpush1.msra.mxu0 0.0
    %606 = vmatprep.subr.mxu0 0.0
    %607 = vmatpush1.msra.mxu0 0.0
    %608 = vmatprep.subr.mxu0 0.0
    %609 = vmatpush1.msra.mxu0 0.0
    %610 = vmatprep.subr.mxu0 0.0
    %611 = vmatpush1.msra.mxu0 0.0
    %612 = vmatprep.subr.mxu0 0.0
    %613 = vmatpush1.msra.mxu0 0.0
    %614 = vmatprep.subr.mxu0 0.0
    %615 = vmatpush1.msra.mxu0 0.0
    %616 = vmatprep.subr.mxu0 0.0
    %617 = vmatpush1.msra.mxu0 0.0
    %618 = vmatprep.subr.mxu0 0.0
    %619 = vmatpush1.msra.mxu0 0.0
    %620 = vmatprep.subr.mxu0 0.0
    %621 = vmatpush1.msra.mxu0 0.0
    %622 = vmatprep.subr.mxu0 0.0
    %623 = vmatpush1.msra.mxu0 0.0
    %624 = vmatprep.subr.mxu0 0.0
    %625 = vmatpush1.msra.mxu0 0.0
    %626 = vmatprep.subr.mxu0 0.0
    %627 = vmatpush1.msra.mxu0 0.0
    %628 = vmatprep.subr.mxu0 0.0
    %629 = vmatpush1.msra.mxu0 0.0
    %630 = vmatprep.subr.mxu0 0.0
    %631 = vmatpush1.msra.mxu0 0.0
    %632 = vmatprep.subr.mxu0 0.0
    %633 = vmatpush1.msra.mxu0 0.0
    %634 = vmatprep.subr.mxu0 0.0
    %635 = vmatpush1.msra.mxu0 0.0
    %636 = vmatprep.subr.mxu0 0.0
    %637 = vmatpush1.msra.mxu0 0.0
    %638 = vmatprep.mubr.f32.mxu0 0.0
    %639 = vmatmul.mubr.f32.gmra.mrb[0].mxu0 %v569
    %v640 = vpop.f32.mrb[0].mxu0
    %v641 = vadd.f32 0.0, %v640
    %v642 = vpop.f32.mrb[0].mxu0
    %643 = vmatprep.mubr.f32.mxu0 0.0
    %644 = vmatmul.mubr.f32.gmra.mrb[0].mxu0 %v572
    %v645 = vpop.f32.mrb[0].mxu0
    %v646 = vadd.f32 0.0, %v645
    %v647 = vpop.f32.mrb[0].mxu0
    %648 = vdwg.mxu0
    %v650 = vsel %vm452, %v488, 0
    %v653 = vsel %vm452, %v490, 0
    %655 = vmatprep.subr.mxu0 0.0
    %656 = vmatpush1.msra.mxu0 %v491
    %657 = vmatprep.subr.mxu0 0.0
    %658 = vmatpush1.msra.mxu0 0.0
    %659 = vmatprep.subr.mxu0 0.0
    %660 = vmatpush1.msra.mxu0 0.0
    %661 = vmatprep.subr.mxu0 0.0
    %662 = vmatpush1.msra.mxu0 0.0
    %663 = vmatprep.subr.mxu0 0.0
    %664 = vmatpush1.msra.mxu0 0.0
    %665 = vmatprep.subr.mxu0 0.0
    %666 = vmatpush1.msra.mxu0 0.0
    %667 = vmatprep.subr.mxu0 0.0
    %668 = vmatpush1.msra.mxu0 0.0
    %669 = vmatprep.subr.mxu0 0.0
    %670 = vmatpush1.msra.mxu0 0.0
    %671 = vmatprep.subr.mxu0 0.0
    %672 = vmatpush1.msra.mxu0 0.0
    %673 = vmatprep.subr.mxu0 0.0
    %674 = vmatpush1.msra.mxu0 0.0
    %675 = vmatprep.subr.mxu0 0.0
    %676 = vmatpush1.msra.mxu0 0.0
    %677 = vmatprep.subr.mxu0 0.0
    %678 = vmatpush1.msra.mxu0 0.0
    %679 = vmatprep.subr.mxu0 0.0
    %680 = vmatpush1.msra.mxu0 0.0
    %681 = vmatprep.subr.mxu0 0.0
    %682 = vmatpush1.msra.mxu0 0.0
    %683 = vmatprep.subr.mxu0 0.0
    %684 = vmatpush1.msra.mxu0 0.0
    %685 = vmatprep.subr.mxu0 0.0
    %686 = vmatpush1.msra.mxu0 0.0
    %687 = vmatprep.subr.mxu0 0.0
    %688 = vmatpush1.msra.mxu0 0.0
    %689 = vmatprep.subr.mxu0 0.0
    %690 = vmatpush1.msra.mxu0 0.0
    %691 = vmatprep.subr.mxu0 0.0
    %692 = vmatpush1.msra.mxu0 0.0
    %693 = vmatprep.subr.mxu0 0.0
    %694 = vmatpush1.msra.mxu0 0.0
    %695 = vmatprep.subr.mxu0 0.0
    %696 = vmatpush1.msra.mxu0 0.0
    %697 = vmatprep.subr.mxu0 0.0
    %698 = vmatpush1.msra.mxu0 0.0
    %699 = vmatprep.subr.mxu0 0.0
    %700 = vmatpush1.msra.mxu0 0.0
    %701 = vmatprep.subr.mxu0 0.0
    %702 = vmatpush1.msra.mxu0 0.0
    %703 = vmatprep.subr.mxu0 0.0
    %704 = vmatpush1.msra.mxu0 0.0
    %705 = vmatprep.subr.mxu0 0.0
    %706 = vmatpush1.msra.mxu0 0.0
    %707 = vmatprep.subr.mxu0 0.0
    %708 = vmatpush1.msra.mxu0 0.0
    %709 = vmatprep.subr.mxu0 0.0
    %710 = vmatpush1.msra.mxu0 0.0
    %711 = vmatprep.subr.mxu0 0.0
    %712 = vmatpush1.msra.mxu0 0.0
    %713 = vmatprep.subr.mxu0 0.0
    %714 = vmatpush1.msra.mxu0 0.0
    %715 = vmatprep.subr.mxu0 0.0
    %716 = vmatpush1.msra.mxu0 0.0
    %717 = vmatprep.subr.mxu0 0.0
    %718 = vmatpush1.msra.mxu0 0.0
    %719 = vmatprep.mubr.f32.mxu0 0.0
    %720 = vmatmul.mubr.f32.gmra.mrb[0].mxu0 %v650
    %v721 = vpop.f32.mrb[0].mxu0
    %v722 = vadd.f32 %v641, %v721
    %v723 = vpop.f32.mrb[0].mxu0
    %724 = vmatprep.mubr.f32.mxu0 0.0
    %725 = vmatmul.mubr.f32.gmra.mrb[0].mxu0 %v653
    %v726 = vpop.f32.mrb[0].mxu0
    %v727 = vadd.f32 %v646, %v726
    %v728 = vpop.f32.mrb[0].mxu0
    %729 = vdwg.mxu0
    %730 = vset.pattern.permute.xlu0 2
    %731 = vperm.xlu0 %730, %v224
    %v732 = vpop.permute.xlu0 %731
    %734 = vset.pattern.permute.xlu0 2
    %735 = vperm.xlu0 %734, %v229
    %v736 = vpop.permute.xlu0 %735
    %v738 = vlaneseq
    %v739 = vshrl.u32 %v738, 7
    %v740 = vsub.s32 2, %v739
    %v741 = vrot.slane %v312, %v740
    %v742 = vlaneseq
    %v743 = vshrl.u32 %v742, 7
    %v744 = vsub.s32 2, %v743
    %v745 = vrot.slane %v385, %v744
    %v746 = vadd.f32 %v732, %v741
    %v747 = vadd.f32 %v736, %v745
    %s748 = sld [smem:[#allocation2 + $0x82]]
    %v749 = vstv %s748
    %v750 = vadd.f32 %v746, %v749
    %v751 = vadd.f32 %v747, %v749
    %s752 = sld [smem:[#allocation2 + $0x2]]
    %v753 = vstv %s752
    %v754 = vmul.f32 %v753, %v408
    %v755 = vmul.f32 %v753, %v409
    %v756 = vadd.f32 %v750, %v754
    %v757 = vadd.f32 %v751, %v755
    %vm758 = vcmp.gt.f32.partialorder %v756, 0.0
    %vm759 = vcmp.gt.f32.partialorder %v757, 0.0
    %v760 = vmul.f32 %v756, 0.2
    %v761 = vmul.f32 %v757, 0.2
    %v762 = vsel %vm758, %v756, %v760
    %v763 = vsel %vm759, %v757, %v761
    %v764 = vadd.f32 %v762, %v412
    %v765 = vadd.f32 %v763, %v413
    %v766 = vsel %vm452, %v764, -inf
    %v767 = vrot.slane %v766, 4
    %v768 = vmax.f32 %v766, %v767
    %v769 = vrot.slane %v768, 2
    %v770 = vmax.f32 %v768, %v769
    %v771 = vrot.slane %v770, 1
    %v772 = vmax.f32 %v770, %v771
    %v773 = vsel %vm452, %v765, -inf
    %v774 = vrot.slane %v773, 4
    %v775 = vmax.f32 %v773, %v774
    %v776 = vrot.slane %v775, 2
    %v777 = vmax.f32 %v775, %v776
    %v778 = vrot.slane %v777, 1
    %v779 = vmax.f32 %v777, %v778
    %v780 = vsub.f32 %v764, %v772
    %v781 = vsub.f32 %v765, %v779
    %v782 = vmul.f32 %v780, 1.442695
    %v783 = vpow.pop %v782
    %v784 = vmul.f32 %v781, 1.442695
    %v785 = vpow.pop %v784
    %v786 = vsel %vm452, %v783, 0.0
    %v787 = vrot.slane %v786, 4
    %v788 = vadd.f32 %v786, %v787
    %v789 = vrot.slane %v788, 2
    %v790 = vadd.f32 %v788, %v789
    %v791 = vrot.slane %v790, 1
    %v792 = vadd.f32 %v790, %v791
    %v793 = vsel %vm452, %v785, 0.0
    %v794 = vrot.slane %v793, 4
    %v795 = vadd.f32 %v793, %v794
    %v796 = vrot.slane %v795, 2
    %v797 = vadd.f32 %v795, %v796
    %v798 = vrot.slane %v797, 1
    %v799 = vadd.f32 %v797, %v798
    %v800 = vrcp.pop %v792
    %v801 = vmul.f32 %v783, %v800
    %v802 = vrcp.pop %v799
    %v803 = vmul.f32 %v785, %v802
    %s804 = scalar_lea.vmem %s7, 16
    %v805 = vld [vmem:[%s804] sm:$0xff]
    %v807 = vsel %vm452, %v801, 0
    %v810 = vsel %vm452, %v803, 0
    %812 = vmatprep.subr.mxu0 0.0
    %813 = vmatpush1.msra.mxu0 %v805
    %814 = vmatprep.subr.mxu0 0.0
    %815 = vmatpush1.msra.mxu0 0.0
    %816 = vmatprep.subr.mxu0 0.0
    %817 = vmatpush1.msra.mxu0 0.0
    %818 = vmatprep.subr.mxu0 0.0
    %819 = vmatpush1.msra.mxu0 0.0
    %820 = vmatprep.subr.mxu0 0.0
    %821 = vmatpush1.msra.mxu0 0.0
    %822 = vmatprep.subr.mxu0 0.0
    %823 = vmatpush1.msra.mxu0 0.0
    %824 = vmatprep.subr.mxu0 0.0
    %825 = vmatpush1.msra.mxu0 0.0
    %826 = vmatprep.subr.mxu0 0.0
    %827 = vmatpush1.msra.mxu0 0.0
    %828 = vmatprep.subr.mxu0 0.0
    %829 = vmatpush1.msra.mxu0 0.0
    %830 = vmatprep.subr.mxu0 0.0
    %831 = vmatpush1.msra.mxu0 0.0
    %832 = vmatprep.subr.mxu0 0.0
    %833 = vmatpush1.msra.mxu0 0.0
    %834 = vmatprep.subr.mxu0 0.0
    %835 = vmatpush1.msra.mxu0 0.0
    %836 = vmatprep.subr.mxu0 0.0
    %837 = vmatpush1.msra.mxu0 0.0
    %838 = vmatprep.subr.mxu0 0.0
    %839 = vmatpush1.msra.mxu0 0.0
    %840 = vmatprep.subr.mxu0 0.0
    %841 = vmatpush1.msra.mxu0 0.0
    %842 = vmatprep.subr.mxu0 0.0
    %843 = vmatpush1.msra.mxu0 0.0
    %844 = vmatprep.subr.mxu0 0.0
    %845 = vmatpush1.msra.mxu0 0.0
    %846 = vmatprep.subr.mxu0 0.0
    %847 = vmatpush1.msra.mxu0 0.0
    %848 = vmatprep.subr.mxu0 0.0
    %849 = vmatpush1.msra.mxu0 0.0
    %850 = vmatprep.subr.mxu0 0.0
    %851 = vmatpush1.msra.mxu0 0.0
    %852 = vmatprep.subr.mxu0 0.0
    %853 = vmatpush1.msra.mxu0 0.0
    %854 = vmatprep.subr.mxu0 0.0
    %855 = vmatpush1.msra.mxu0 0.0
    %856 = vmatprep.subr.mxu0 0.0
    %857 = vmatpush1.msra.mxu0 0.0
    %858 = vmatprep.subr.mxu0 0.0
    %859 = vmatpush1.msra.mxu0 0.0
    %860 = vmatprep.subr.mxu0 0.0
    %861 = vmatpush1.msra.mxu0 0.0
    %862 = vmatprep.subr.mxu0 0.0
    %863 = vmatpush1.msra.mxu0 0.0
    %864 = vmatprep.subr.mxu0 0.0
    %865 = vmatpush1.msra.mxu0 0.0
    %866 = vmatprep.subr.mxu0 0.0
    %867 = vmatpush1.msra.mxu0 0.0
    %868 = vmatprep.subr.mxu0 0.0
    %869 = vmatpush1.msra.mxu0 0.0
    %870 = vmatprep.subr.mxu0 0.0
    %871 = vmatpush1.msra.mxu0 0.0
    %872 = vmatprep.subr.mxu0 0.0
    %873 = vmatpush1.msra.mxu0 0.0
    %874 = vmatprep.subr.mxu0 0.0
    %875 = vmatpush1.msra.mxu0 0.0
    %876 = vmatprep.mubr.f32.mxu0 0.0
    %877 = vmatmul.mubr.f32.gmra.mrb[0].mxu0 %v807
    %v878 = vpop.f32.mrb[0].mxu0
    %v879 = vadd.f32 0.0, %v878
    %v880 = vpop.f32.mrb[0].mxu0
    %881 = vmatprep.mubr.f32.mxu0 0.0
    %882 = vmatmul.mubr.f32.gmra.mrb[0].mxu0 %v810
    %v883 = vpop.f32.mrb[0].mxu0
    %v884 = vadd.f32 0.0, %v883
    %v885 = vpop.f32.mrb[0].mxu0
    %886 = vdwg.mxu0
    %v887 = vadd.f32 %v722, %v879
    %v888 = vadd.f32 %v727, %v884
    %889 = vset.pattern.permute.xlu0 3
    %890 = vperm.xlu0 %889, %v224
    %v891 = vpop.permute.xlu0 %890
    %893 = vset.pattern.permute.xlu0 3
    %894 = vperm.xlu0 %893, %v229
    %v895 = vpop.permute.xlu0 %894
    %v897 = vlaneseq
    %v898 = vshrl.u32 %v897, 7
    %v899 = vsub.s32 3, %v898
    %v900 = vrot.slane %v312, %v899
    %v901 = vlaneseq
    %v902 = vshrl.u32 %v901, 7
    %v903 = vsub.s32 3, %v902
    %v904 = vrot.slane %v385, %v903
    %v905 = vadd.f32 %v891, %v900
    %v906 = vadd.f32 %v895, %v904
    %s907 = sld [smem:[#allocation2 + $0x83]]
    %v908 = vstv %s907
    %v909 = vadd.f32 %v905, %v908
    %v910 = vadd.f32 %v906, %v908
    %s911 = sld [smem:[#allocation2 + $0x3]]
    %v912 = vstv %s911
    %v913 = vmul.f32 %v912, %v408
    %v914 = vmul.f32 %v912, %v409
    %v915 = vadd.f32 %v909, %v913
    %v916 = vadd.f32 %v910, %v914
    %vm917 = vcmp.gt.f32.partialorder %v915, 0.0
    %vm918 = vcmp.gt.f32.partialorder %v916, 0.0
    %v919 = vmul.f32 %v915, 0.2
    %v920 = vmul.f32 %v916, 0.2
    %v921 = vsel %vm917, %v915, %v919
    %v922 = vsel %vm918, %v916, %v920
    %v923 = vadd.f32 %v921, %v412
    %v924 = vadd.f32 %v922, %v413
    %v925 = vsel %vm452, %v923, -inf
    %v926 = vrot.slane %v925, 4
    %v927 = vmax.f32 %v925, %v926
    %v928 = vrot.slane %v927, 2
    %v929 = vmax.f32 %v927, %v928
    %v930 = vrot.slane %v929, 1
    %v931 = vmax.f32 %v929, %v930
    %v932 = vsel %vm452, %v924, -inf
    %v933 = vrot.slane %v932, 4
    %v934 = vmax.f32 %v932, %v933
    %v935 = vrot.slane %v934, 2
    %v936 = vmax.f32 %v934, %v935
    %v937 = vrot.slane %v936, 1
    %v938 = vmax.f32 %v936, %v937
    %v939 = vsub.f32 %v923, %v931
    %v940 = vsub.f32 %v924, %v938
    %v941 = vmul.f32 %v939, 1.442695
    %v942 = vpow.pop %v941
    %v943 = vmul.f32 %v940, 1.442695
    %v944 = vpow.pop %v943
    %v945 = vsel %vm452, %v942, 0.0
    %v946 = vrot.slane %v945, 4
    %v947 = vadd.f32 %v945, %v946
    %v948 = vrot.slane %v947, 2
    %v949 = vadd.f32 %v947, %v948
    %v950 = vrot.slane %v949, 1
    %v951 = vadd.f32 %v949, %v950
    %v952 = vsel %vm452, %v944, 0.0
    %v953 = vrot.slane %v952, 4
    %v954 = vadd.f32 %v952, %v953
    %v955 = vrot.slane %v954, 2
    %v956 = vadd.f32 %v954, %v955
    %v957 = vrot.slane %v956, 1
    %v958 = vadd.f32 %v956, %v957
    %v959 = vrcp.pop %v951
    %v960 = vmul.f32 %v942, %v959
    %v961 = vrcp.pop %v958
    %v962 = vmul.f32 %v944, %v961
    %s963 = scalar_lea.vmem %s7, 24
    %v964 = vld [vmem:[%s963] sm:$0xff]
    %v966 = vsel %vm452, %v960, 0
    %v969 = vsel %vm452, %v962, 0
    %971 = vmatprep.subr.mxu0 0.0
    %972 = vmatpush1.msra.mxu0 %v964
    %973 = vmatprep.subr.mxu0 0.0
    %974 = vmatpush1.msra.mxu0 0.0
    %975 = vmatprep.subr.mxu0 0.0
    %976 = vmatpush1.msra.mxu0 0.0
    %977 = vmatprep.subr.mxu0 0.0
    %978 = vmatpush1.msra.mxu0 0.0
    %979 = vmatprep.subr.mxu0 0.0
    %980 = vmatpush1.msra.mxu0 0.0
    %981 = vmatprep.subr.mxu0 0.0
    %982 = vmatpush1.msra.mxu0 0.0
    %983 = vmatprep.subr.mxu0 0.0
    %984 = vmatpush1.msra.mxu0 0.0
    %985 = vmatprep.subr.mxu0 0.0
    %986 = vmatpush1.msra.mxu0 0.0
    %987 = vmatprep.subr.mxu0 0.0
    %988 = vmatpush1.msra.mxu0 0.0
    %989 = vmatprep.subr.mxu0 0.0
    %990 = vmatpush1.msra.mxu0 0.0
    %991 = vmatprep.subr.mxu0 0.0
    %992 = vmatpush1.msra.mxu0 0.0
    %993 = vmatprep.subr.mxu0 0.0
    %994 = vmatpush1.msra.mxu0 0.0
    %995 = vmatprep.subr.mxu0 0.0
    %996 = vmatpush1.msra.mxu0 0.0
    %997 = vmatprep.subr.mxu0 0.0
    %998 = vmatpush1.msra.mxu0 0.0
    %999 = vmatprep.subr.mxu0 0.0
    %1000 = vmatpush1.msra.mxu0 0.0
    %1001 = vmatprep.subr.mxu0 0.0
    %1002 = vmatpush1.msra.mxu0 0.0
    %1003 = vmatprep.subr.mxu0 0.0
    %1004 = vmatpush1.msra.mxu0 0.0
    %1005 = vmatprep.subr.mxu0 0.0
    %1006 = vmatpush1.msra.mxu0 0.0
    %1007 = vmatprep.subr.mxu0 0.0
    %1008 = vmatpush1.msra.mxu0 0.0
    %1009 = vmatprep.subr.mxu0 0.0
    %1010 = vmatpush1.msra.mxu0 0.0
    %1011 = vmatprep.subr.mxu0 0.0
    %1012 = vmatpush1.msra.mxu0 0.0
    %1013 = vmatprep.subr.mxu0 0.0
    %1014 = vmatpush1.msra.mxu0 0.0
    %1015 = vmatprep.subr.mxu0 0.0
    %1016 = vmatpush1.msra.mxu0 0.0
    %1017 = vmatprep.subr.mxu0 0.0
    %1018 = vmatpush1.msra.mxu0 0.0
    %1019 = vmatprep.subr.mxu0 0.0
    %1020 = vmatpush1.msra.mxu0 0.0
    %1021 = vmatprep.subr.mxu0 0.0
    %1022 = vmatpush1.msra.mxu0 0.0
    %1023 = vmatprep.subr.mxu0 0.0
    %1024 = vmatpush1.msra.mxu0 0.0
    %1025 = vmatprep.subr.mxu0 0.0
    %1026 = vmatpush1.msra.mxu0 0.0
    %1027 = vmatprep.subr.mxu0 0.0
    %1028 = vmatpush1.msra.mxu0 0.0
    %1029 = vmatprep.subr.mxu0 0.0
    %1030 = vmatpush1.msra.mxu0 0.0
    %1031 = vmatprep.subr.mxu0 0.0
    %1032 = vmatpush1.msra.mxu0 0.0
    %1033 = vmatprep.subr.mxu0 0.0
    %1034 = vmatpush1.msra.mxu0 0.0
    %1035 = vmatprep.mubr.f32.mxu0 0.0
    %1036 = vmatmul.mubr.f32.gmra.mrb[0].mxu0 %v966
    %v1037 = vpop.f32.mrb[0].mxu0
    %v1038 = vadd.f32 0.0, %v1037
    %v1039 = vpop.f32.mrb[0].mxu0
    %1040 = vmatprep.mubr.f32.mxu0 0.0
    %1041 = vmatmul.mubr.f32.gmra.mrb[0].mxu0 %v969
    %v1042 = vpop.f32.mrb[0].mxu0
    %v1043 = vadd.f32 0.0, %v1042
    %v1044 = vpop.f32.mrb[0].mxu0
    %1045 = vdwg.mxu0
    %v1046 = vadd.f32 %v887, %v1038
    %v1047 = vadd.f32 %v888, %v1043
    %v1049 = vsel %vm59, %v1046, 0
    %1051 = vmatprep.subr.mxu0 0.0
    %1052 = vmatpush1.msra.mxu0 %v133
    %1053 = vmatprep.subr.mxu0 0.0
    %1054 = vmatpush1.msra.mxu0 %v391
    %1055 = vmatprep.subr.mxu0 0.0
    %1056 = vmatpush1.msra.mxu0 %v397
    %1057 = vmatprep.subr.mxu0 0.0
    %1058 = vmatpush1.msra.mxu0 %v403
    %1059 = vmatprep.subr.mxu0 0.0
    %1060 = vmatpush1.msra.mxu0 0.0
    %1061 = vmatprep.subr.mxu0 0.0
    %1062 = vmatpush1.msra.mxu0 0.0
    %1063 = vmatprep.subr.mxu0 0.0
    %1064 = vmatpush1.msra.mxu0 0.0
    %1065 = vmatprep.subr.mxu0 0.0
    %1066 = vmatpush1.msra.mxu0 0.0
    %1067 = vmatprep.subr.mxu0 0.0
    %1068 = vmatpush1.msra.mxu0 0.0
    %1069 = vmatprep.subr.mxu0 0.0
    %1070 = vmatpush1.msra.mxu0 0.0
    %1071 = vmatprep.subr.mxu0 0.0
    %1072 = vmatpush1.msra.mxu0 0.0
    %1073 = vmatprep.subr.mxu0 0.0
    %1074 = vmatpush1.msra.mxu0 0.0
    %1075 = vmatprep.subr.mxu0 0.0
    %1076 = vmatpush1.msra.mxu0 0.0
    %1077 = vmatprep.subr.mxu0 0.0
    %1078 = vmatpush1.msra.mxu0 0.0
    %1079 = vmatprep.subr.mxu0 0.0
    %1080 = vmatpush1.msra.mxu0 0.0
    %1081 = vmatprep.subr.mxu0 0.0
    %1082 = vmatpush1.msra.mxu0 0.0
    %1083 = vmatprep.subr.mxu0 0.0
    %1084 = vmatpush1.msra.mxu0 0.0
    %1085 = vmatprep.subr.mxu0 0.0
    %1086 = vmatpush1.msra.mxu0 0.0
    %1087 = vmatprep.subr.mxu0 0.0
    %1088 = vmatpush1.msra.mxu0 0.0
    %1089 = vmatprep.subr.mxu0 0.0
    %1090 = vmatpush1.msra.mxu0 0.0
    %1091 = vmatprep.subr.mxu0 0.0
    %1092 = vmatpush1.msra.mxu0 0.0
    %1093 = vmatprep.subr.mxu0 0.0
    %1094 = vmatpush1.msra.mxu0 0.0
    %1095 = vmatprep.subr.mxu0 0.0
    %1096 = vmatpush1.msra.mxu0 0.0
    %1097 = vmatprep.subr.mxu0 0.0
    %1098 = vmatpush1.msra.mxu0 0.0
    %1099 = vmatprep.subr.mxu0 0.0
    %1100 = vmatpush1.msra.mxu0 0.0
    %1101 = vmatprep.subr.mxu0 0.0
    %1102 = vmatpush1.msra.mxu0 0.0
    %1103 = vmatprep.subr.mxu0 0.0
    %1104 = vmatpush1.msra.mxu0 0.0
    %1105 = vmatprep.subr.mxu0 0.0
    %1106 = vmatpush1.msra.mxu0 0.0
    %1107 = vmatprep.subr.mxu0 0.0
    %1108 = vmatpush1.msra.mxu0 0.0
    %1109 = vmatprep.subr.mxu0 0.0
    %1110 = vmatpush1.msra.mxu0 0.0
    %1111 = vmatprep.subr.mxu0 0.0
    %1112 = vmatpush1.msra.mxu0 0.0
    %1113 = vmatprep.subr.mxu0 0.0
    %1114 = vmatpush1.msra.mxu0 0.0
    %1115 = vmatprep.mubr.f32.mxu0 0.0
    %1116 = vmatmul.mubr.f32.gmra.mrb[0].mxu0 %v1049
    %v1117 = vpop.f32.mrb[0].mxu0
    %v1118 = vadd.f32 0.0, %v1117
    %v1119 = vpop.f32.mrb[0].mxu0
    %1120 = vdwg.mxu0
    %v1122 = vsel %vm59, %v1047, 0
    %1124 = vmatprep.subr.mxu0 0.0
    %1125 = vmatpush1.msra.mxu0 %v138
    %1126 = vmatprep.subr.mxu0 0.0
    %1127 = vmatpush1.msra.mxu0 %v393
    %1128 = vmatprep.subr.mxu0 0.0
    %1129 = vmatpush1.msra.mxu0 %v399
    %1130 = vmatprep.subr.mxu0 0.0
    %1131 = vmatpush1.msra.mxu0 %v405
    %1132 = vmatprep.subr.mxu0 0.0
    %1133 = vmatpush1.msra.mxu0 0.0
    %1134 = vmatprep.subr.mxu0 0.0
    %1135 = vmatpush1.msra.mxu0 0.0
    %1136 = vmatprep.subr.mxu0 0.0
    %1137 = vmatpush1.msra.mxu0 0.0
    %1138 = vmatprep.subr.mxu0 0.0
    %1139 = vmatpush1.msra.mxu0 0.0
    %1140 = vmatprep.subr.mxu0 0.0
    %1141 = vmatpush1.msra.mxu0 0.0
    %1142 = vmatprep.subr.mxu0 0.0
    %1143 = vmatpush1.msra.mxu0 0.0
    %1144 = vmatprep.subr.mxu0 0.0
    %1145 = vmatpush1.msra.mxu0 0.0
    %1146 = vmatprep.subr.mxu0 0.0
    %1147 = vmatpush1.msra.mxu0 0.0
    %1148 = vmatprep.subr.mxu0 0.0
    %1149 = vmatpush1.msra.mxu0 0.0
    %1150 = vmatprep.subr.mxu0 0.0
    %1151 = vmatpush1.msra.mxu0 0.0
    %1152 = vmatprep.subr.mxu0 0.0
    %1153 = vmatpush1.msra.mxu0 0.0
    %1154 = vmatprep.subr.mxu0 0.0
    %1155 = vmatpush1.msra.mxu0 0.0
    %1156 = vmatprep.subr.mxu0 0.0
    %1157 = vmatpush1.msra.mxu0 0.0
    %1158 = vmatprep.subr.mxu0 0.0
    %1159 = vmatpush1.msra.mxu0 0.0
    %1160 = vmatprep.subr.mxu0 0.0
    %1161 = vmatpush1.msra.mxu0 0.0
    %1162 = vmatprep.subr.mxu0 0.0
    %1163 = vmatpush1.msra.mxu0 0.0
    %1164 = vmatprep.subr.mxu0 0.0
    %1165 = vmatpush1.msra.mxu0 0.0
    %1166 = vmatprep.subr.mxu0 0.0
    %1167 = vmatpush1.msra.mxu0 0.0
    %1168 = vmatprep.subr.mxu0 0.0
    %1169 = vmatpush1.msra.mxu0 0.0
    %1170 = vmatprep.subr.mxu0 0.0
    %1171 = vmatpush1.msra.mxu0 0.0
    %1172 = vmatprep.subr.mxu0 0.0
    %1173 = vmatpush1.msra.mxu0 0.0
    %1174 = vmatprep.subr.mxu0 0.0
    %1175 = vmatpush1.msra.mxu0 0.0
    %1176 = vmatprep.subr.mxu0 0.0
    %1177 = vmatpush1.msra.mxu0 0.0
    %1178 = vmatprep.subr.mxu0 0.0
    %1179 = vmatpush1.msra.mxu0 0.0
    %1180 = vmatprep.subr.mxu0 0.0
    %1181 = vmatpush1.msra.mxu0 0.0
    %1182 = vmatprep.subr.mxu0 0.0
    %1183 = vmatpush1.msra.mxu0 0.0
    %1184 = vmatprep.subr.mxu0 0.0
    %1185 = vmatpush1.msra.mxu0 0.0
    %1186 = vmatprep.subr.mxu0 0.0
    %1187 = vmatpush1.msra.mxu0 0.0
    %1188 = vmatprep.mubr.f32.mxu0 0.0
    %1189 = vmatmul.mubr.f32.gmra.mrb[0].mxu0 %v1122
    %v1190 = vpop.f32.mrb[0].mxu0
    %v1191 = vadd.f32 0.0, %v1190
    %v1192 = vpop.f32.mrb[0].mxu0
    %1193 = vdwg.mxu0
    %v1194 = vmul.f32 %v1118, 0.25
    %v1195 = vmul.f32 %v1191, 0.25
    %v1196 = vmax.f32 %v1194, 0.0
    %v1197 = vmax.f32 %v1195, 0.0
    %1198 = vst.msk [vmem:[#allocation5] sm:$0xff] %vm59, %v1196
    %1199 = vst.msk [vmem:[#allocation5 + $0x8] sm:$0xff] %vm59, %v1197
    // Predicated region
    $region42: #{tpu_custom_call.1} parent=1 // pred_check
      _
    $region43: #{tpu_custom_call.1} parent=1 // pred_check_branch
      %1201 = sbr.rel (0) target = $region45
    $region44: #{tpu_custom_call.1} parent=1 // pred_region
      %s1203 = ssub.s32 256, 256
      %1204 = vsyncadd [#allocation3], %s1203
      %s1205 = sshll.u32 [#allocation5], 4
      %s1206 = int_to_ptr.vmem [resolvable:$true] %s1205
      %1211 = dma.vmem_to_hbm [thread:$0]  %s1206, 256, %s9, [#allocation3], 128, 128, 8
    $region45: #{tpu_custom_call.1} parent=1 // pred_fallthru
      _
    // Predicated region
    $region46: #{tpu_custom_call.1} parent=1 // pred_check
      _
    $region47: #{tpu_custom_call.1} parent=1 // pred_check_branch
      %1213 = sbr.rel (0) target = $region49
    $region48: #{tpu_custom_call.1} parent=1 // pred_region
      %1214 = dma.done [#allocation3], 256
    $region49: #{tpu_custom_call.1} parent=1 // pred_fallthru
      _
    %1215 = vsyncpa [#allocation3], 1
    %1216 = vsyncpa [#allocation4], 1

</llo_original>
